<compile_context>
chip_gen: v7x
topology: tpu7x:2x2x1
jax: 0.10.0
libtpu: 0.0.40
codegen_flags: <defaults>
</compile_context>

<pallas_src>
import functools
import math

import jax
import jax.numpy as jnp
from jax.experimental import pallas as pl
from jax.experimental.pallas import tpu as pltpu

NUM_FREQUENCIES = 4
ENCODED_DIM = 2 + 4 * NUM_FREQUENCIES      # 18
HIDDEN = 32
OUT_DIM = 2
W0 = 30.0                                  # SIREN frequency scale (folded into params)
TILE_MAX = 8192                            # max batch tile (rows on the lane axis)


def _round_up(x, m):
    return (x + m - 1) // m * m


def _wind_kernel(x_ref, w1x_ref, w1s_ref, w1c_ref, b1_ref,
                 w2_ref, b2_ref, w3_ref, b3_ref, out_ref,
                 *, num_frequencies):
    # x: (2, TILE) -- coords on sublanes, batch on lanes (lane-dense).
    x = x_ref[...].astype(jnp.float32)

    # ---- PositionEncoder + first SIREN layer, fused ------------------------
    # One sin/cos polynomial pair only; higher frequencies via angle doubling.
    theta = jnp.float32(math.pi) * x
    s = jnp.sin(theta)                                   # sin(pi x)   (2, TILE)
    c = jnp.cos(theta)                                   # cos(pi x)   (2, TILE)

    acc = jnp.dot(w1x_ref[...], x, preferred_element_type=jnp.float32)
    acc = acc + b1_ref[...]
    for k in range(num_frequencies):
        acc = acc + jnp.dot(w1s_ref[k], s, preferred_element_type=jnp.float32)
        acc = acc + jnp.dot(w1c_ref[k], c, preferred_element_type=jnp.float32)
        if k + 1 < num_frequencies:
            s, c = 2.0 * s * c, 2.0 * (c * c) - 1.0      # double-angle recurrence

    # ---- SIREN MLP (W0 already folded into weights/biases) -----------------
    h = jnp.sin(acc)                                                        # (H, TILE)
    h = jnp.sin(jnp.dot(w2_ref[...], h,
                        preferred_element_type=jnp.float32) + b2_ref[...])  # (H, TILE)
    y = jnp.dot(w3_ref[...], h,
                preferred_element_type=jnp.float32) + b3_ref[...]           # (2, TILE)

    out_ref[...] = y.astype(out_ref.dtype)


def _pick_tiling(n, tile_max):
    """Lane-aligned tile + padded length with bounded waste and >= 2 grid steps."""
    n128 = _round_up(max(n, 1), 128)
    tile_max = max(128, (tile_max // 128) * 128)
    # >= 2 grid steps whenever possible (lets the "parallel" batch axis shard
    # across both v7x TensorCores); waste is bounded to < 128 rows per step.
    steps = 1 if n128 <= 128 else max(2, pl.cdiv(n128, tile_max))
    tile = _round_up(pl.cdiv(n128, steps), 128)
    return tile, steps * tile


def wind_model_pallas_coords_major(x2n, params, *, tile_max=TILE_MAX):
    """x2n: (2, n) coords-major -> (2, n) predicted (u, v) wind.

    Coords-major in/out avoids any wrapper-side HBM transpose passes.
    """
    n = x2n.shape[1]
    w1x, w1s, w1c, b1, w2, b2, w3, b3 = params

    tile, n_pad = _pick_tiling(n, tile_max)
    x = x2n.astype(jnp.float32)
    if n_pad != n:
        x = jnp.pad(x, ((0, 0), (0, n_pad - n)))

    kernel = functools.partial(_wind_kernel, num_frequencies=NUM_FREQUENCIES)
    full = lambda a: pl.BlockSpec(a.shape, lambda i: (0,) * a.ndim)

    out = pl.pallas_call(
        kernel,
        out_shape=jax.ShapeDtypeStruct((OUT_DIM, n_pad), jnp.float32),
        grid_spec=pltpu.PrefetchScalarGridSpec(
            num_scalar_prefetch=0,
            grid=(n_pad // tile,),
            in_specs=[
                pl.BlockSpec((2, tile), lambda i: (0, i)),
                full(w1x), full(w1s), full(w1c), full(b1),
                full(w2), full(b2), full(w3), full(b3),
            ],
            out_specs=pl.BlockSpec((OUT_DIM, tile), lambda i: (0, i)),
        ),
        compiler_params=pltpu.CompilerParams(
            dimension_semantics=("parallel",)),
    )(x, w1x, w1s, w1c, b1, w2, b2, w3, b3)

    return out[:, :n]


def wind_model_pallas(lon_lat, params, *, tile_max=TILE_MAX):
    """lon_lat: (n, 2) -> (n, 2), matching the PyTorch module API.

    The two transposes here are pure layout plumbing (separate XLA ops);
    callers that can keep coords-major data should call
    wind_model_pallas_coords_major directly to skip the extra HBM passes.
    """
    out = wind_model_pallas_coords_major(lon_lat.T, params, tile_max=tile_max)
    return out.T


def init_params(key):
    """SIREN-style init with W0 folded; first-layer weight pre-split.

    Returns (w1x, w1s, w1c, b1, w2, b2, w3, b3):
      w1x: (H, 2)     multiplies the raw coords
      w1s: (F, H, 2)  w1s[k] multiplies sin(2^k * pi * x)
      w1c: (F, H, 2)  w1c[k] multiplies cos(2^k * pi * x)
    Weights are stored transposed (out_features, in_features); biases (out, 1).
    """
    k1, k2, k3, k4, k5, k6 = jax.random.split(key, 6)

    def uniform(k, shape, bound):
        return jax.random.uniform(k, shape, jnp.float32, -bound, bound)

    w1 = W0 * uniform(k1, (HIDDEN, ENCODED_DIM), 1.0 / ENCODED_DIM)
    b1 = W0 * uniform(k2, (HIDDEN, 1), 1.0 / math.sqrt(ENCODED_DIM))
    w2 = W0 * uniform(k3, (HIDDEN, HIDDEN), math.sqrt(6.0 / HIDDEN) / W0)
    b2 = W0 * uniform(k4, (HIDDEN, 1), 1.0 / math.sqrt(HIDDEN))
    w3 = uniform(k5, (OUT_DIM, HIDDEN), math.sqrt(6.0 / HIDDEN) / W0)
    b3 = uniform(k6, (OUT_DIM, 1), 1.0 / math.sqrt(HIDDEN))

    # Split the first-layer weight by encoded-feature chunk; enc order is
    # [x, sin(pi x), cos(pi x), sin(2 pi x), cos(2 pi x), ...].
    w1x = w1[:, 0:2]
    w1s = jnp.stack([w1[:, 2 + 4 * k: 4 + 4 * k] for k in range(NUM_FREQUENCIES)])
    w1c = jnp.stack([w1[:, 4 + 4 * k: 6 + 4 * k] for k in range(NUM_FREQUENCIES)])
    return (w1x, w1s, w1c, b1, w2, b2, w3, b3)


def wind_model_reference(lon_lat, params):
    """Plain-JAX reference using true sin/cos (same folded parameterization)."""
    w1x, w1s, w1c, b1, w2, b2, w3, b3 = params
    x = lon_lat.astype(jnp.float32)
    acc = x @ w1x.T
    for k in range(NUM_FREQUENCIES):
        scale = (2.0 ** k) * math.pi
        acc = acc + jnp.sin(scale * x) @ w1s[k].T + jnp.cos(scale * x) @ w1c[k].T
    h = jnp.sin(acc + b1.T)
    h = jnp.sin(h @ w2.T + b2.T)
    return h @ w3.T + b3.T


if __name__ == "__main__":
    key = jax.random.PRNGKey(0)
    k_in, k_par = jax.random.split(key)

    # lon/lat normalized to roughly [-1, 1]; small batch (padded/tiled internally).
    lon_lat = jax.random.uniform(k_in, (256, 2), jnp.float32, -1.0, 1.0)
    params = init_params(k_par)

    out = wind_model_pallas(lon_lat, params)
    out = jax.block_until_ready(out)

    ref = wind_model_reference(lon_lat, params)
    assert out.shape == (256, OUT_DIM)
    max_err = jnp.max(jnp.abs(out - ref))
    assert jnp.allclose(out, ref, atol=1e-4, rtol=1e-4), f"max abs err {max_err}"

    print("KERNEL_OK")
</pallas_src>

<mosaic_0001>
module attributes {stable_mosaic.version = 11 : i64} {
  func.func @_wind_kernel(%arg0: i32, %arg1: memref<2x128xf32, #tpu.memory_space<vmem>>, %arg2: memref<32x2xf32, #tpu.memory_space<vmem>>, %arg3: memref<4x32x2xf32, #tpu.memory_space<vmem>>, %arg4: memref<4x32x2xf32, #tpu.memory_space<vmem>>, %arg5: memref<32x1xf32, #tpu.memory_space<vmem>>, %arg6: memref<32x32xf32, #tpu.memory_space<vmem>>, %arg7: memref<32x1xf32, #tpu.memory_space<vmem>>, %arg8: memref<2x32xf32, #tpu.memory_space<vmem>>, %arg9: memref<2x1xf32, #tpu.memory_space<vmem>>, %arg10: memref<2x128xf32, #tpu.memory_space<vmem>>) attributes {dimension_semantics = [#tpu.dimension_semantics<parallel>], iteration_bounds = array<i64: 2>, scalar_prefetch = 0 : i64, scratch_operands = 0 : i64, tpu.core_type = #tpu.core_type<tc>, window_params = [{transform_indices = @transform_0, window_bounds = array<i64: 2, 128>}, {pipeline_mode = #tpu.pipeline_mode<synchronous>, transform_indices = @transform_1, window_bounds = array<i64: 32, 2>}, {pipeline_mode = #tpu.pipeline_mode<synchronous>, transform_indices = @transform_2, window_bounds = array<i64: 4, 32, 2>}, {pipeline_mode = #tpu.pipeline_mode<synchronous>, transform_indices = @transform_3, window_bounds = array<i64: 4, 32, 2>}, {pipeline_mode = #tpu.pipeline_mode<synchronous>, transform_indices = @transform_4, window_bounds = array<i64: 32, 1>}, {pipeline_mode = #tpu.pipeline_mode<synchronous>, transform_indices = @transform_5, window_bounds = array<i64: 32, 32>}, {pipeline_mode = #tpu.pipeline_mode<synchronous>, transform_indices = @transform_6, window_bounds = array<i64: 32, 1>}, {pipeline_mode = #tpu.pipeline_mode<synchronous>, transform_indices = @transform_7, window_bounds = array<i64: 2, 32>}, {pipeline_mode = #tpu.pipeline_mode<synchronous>, transform_indices = @transform_8, window_bounds = array<i64: 2, 1>}, {transform_indices = @transform_9, window_bounds = array<i64: 2, 128>}]} {
    %c0 = arith.constant 0 : index
    %c0_0 = arith.constant 0 : index
    %0 = vector.load %arg1[%c0, %c0_0] : memref<2x128xf32, #tpu.memory_space<vmem>>, vector<2x128xf32>
    %cst = arith.constant 3.14159274 : f32
    %1 = vector.broadcast %cst : f32 to vector<2x128xf32>
    %2 = arith.mulf %1, %0 : vector<2x128xf32>
    %3 = math.sin %2 : vector<2x128xf32>
    %4 = math.cos %2 : vector<2x128xf32>
    %c0_1 = arith.constant 0 : index
    %c0_2 = arith.constant 0 : index
    %5 = vector.load %arg2[%c0_1, %c0_2] : memref<32x2xf32, #tpu.memory_space<vmem>>, vector<32x2xf32>
    %cst_3 = arith.constant dense<0.000000e+00> : vector<32x128xf32>
    %6 = tpu.matmul %5, %0, %cst_3 {dimension_numbers = #tpu.dot_dimension_numbers<[1], [0], [0], [1], [0, 0, 1, 1], [], []>} : vector<32x2xf32>, vector<2x128xf32>, vector<32x128xf32> -> vector<32x128xf32>
    %c0_4 = arith.constant 0 : index
    %c0_5 = arith.constant 0 : index
    %7 = vector.load %arg5[%c0_4, %c0_5] : memref<32x1xf32, #tpu.memory_space<vmem>>, vector<32x1xf32>
    %8 = vector.broadcast %7 : vector<32x1xf32> to vector<32x128xf32>
    %9 = arith.addf %6, %8 : vector<32x128xf32>
    %c0_6 = arith.constant 0 : index
    %c0_7 = arith.constant 0 : index
    %c0_8 = arith.constant 0 : index
    %10 = vector.load %arg3[%c0_6, %c0_7, %c0_8] : memref<4x32x2xf32, #tpu.memory_space<vmem>>, vector<1x32x2xf32>
    %11 = vector.shape_cast %10 : vector<1x32x2xf32> to vector<32x2xf32>
    %cst_9 = arith.constant dense<0.000000e+00> : vector<32x128xf32>
    %12 = tpu.matmul %11, %3, %cst_9 {dimension_numbers = #tpu.dot_dimension_numbers<[1], [0], [0], [1], [0, 0, 1, 1], [], []>} : vector<32x2xf32>, vector<2x128xf32>, vector<32x128xf32> -> vector<32x128xf32>
    %13 = arith.addf %9, %12 : vector<32x128xf32>
    %c0_10 = arith.constant 0 : index
    %c0_11 = arith.constant 0 : index
    %c0_12 = arith.constant 0 : index
    %14 = vector.load %arg4[%c0_10, %c0_11, %c0_12] : memref<4x32x2xf32, #tpu.memory_space<vmem>>, vector<1x32x2xf32>
    %15 = vector.shape_cast %14 : vector<1x32x2xf32> to vector<32x2xf32>
    %cst_13 = arith.constant dense<0.000000e+00> : vector<32x128xf32>
    %16 = tpu.matmul %15, %4, %cst_13 {dimension_numbers = #tpu.dot_dimension_numbers<[1], [0], [0], [1], [0, 0, 1, 1], [], []>} : vector<32x2xf32>, vector<2x128xf32>, vector<32x128xf32> -> vector<32x128xf32>
    %17 = arith.addf %13, %16 : vector<32x128xf32>
    %cst_14 = arith.constant 2.000000e+00 : f32
    %18 = vector.broadcast %cst_14 : f32 to vector<2x128xf32>
    %19 = arith.mulf %18, %3 : vector<2x128xf32>
    %20 = arith.mulf %19, %4 : vector<2x128xf32>
    %21 = arith.mulf %4, %4 : vector<2x128xf32>
    %cst_15 = arith.constant 2.000000e+00 : f32
    %22 = vector.broadcast %cst_15 : f32 to vector<2x128xf32>
    %23 = arith.mulf %22, %21 : vector<2x128xf32>
    %cst_16 = arith.constant 1.000000e+00 : f32
    %24 = vector.broadcast %cst_16 : f32 to vector<2x128xf32>
    %25 = arith.subf %23, %24 : vector<2x128xf32>
    %c1 = arith.constant 1 : index
    %c0_17 = arith.constant 0 : index
    %c0_18 = arith.constant 0 : index
    %26 = vector.load %arg3[%c1, %c0_17, %c0_18] : memref<4x32x2xf32, #tpu.memory_space<vmem>>, vector<1x32x2xf32>
    %27 = vector.shape_cast %26 : vector<1x32x2xf32> to vector<32x2xf32>
    %cst_19 = arith.constant dense<0.000000e+00> : vector<32x128xf32>
    %28 = tpu.matmul %27, %20, %cst_19 {dimension_numbers = #tpu.dot_dimension_numbers<[1], [0], [0], [1], [0, 0, 1, 1], [], []>} : vector<32x2xf32>, vector<2x128xf32>, vector<32x128xf32> -> vector<32x128xf32>
    %29 = arith.addf %17, %28 : vector<32x128xf32>
    %c1_20 = arith.constant 1 : index
    %c0_21 = arith.constant 0 : index
    %c0_22 = arith.constant 0 : index
    %30 = vector.load %arg4[%c1_20, %c0_21, %c0_22] : memref<4x32x2xf32, #tpu.memory_space<vmem>>, vector<1x32x2xf32>
    %31 = vector.shape_cast %30 : vector<1x32x2xf32> to vector<32x2xf32>
    %cst_23 = arith.constant dense<0.000000e+00> : vector<32x128xf32>
    %32 = tpu.matmul %31, %25, %cst_23 {dimension_numbers = #tpu.dot_dimension_numbers<[1], [0], [0], [1], [0, 0, 1, 1], [], []>} : vector<32x2xf32>, vector<2x128xf32>, vector<32x128xf32> -> vector<32x128xf32>
    %33 = arith.addf %29, %32 : vector<32x128xf32>
    %cst_24 = arith.constant 2.000000e+00 : f32
    %34 = vector.broadcast %cst_24 : f32 to vector<2x128xf32>
    %35 = arith.mulf %34, %20 : vector<2x128xf32>
    %36 = arith.mulf %35, %25 : vector<2x128xf32>
    %37 = arith.mulf %25, %25 : vector<2x128xf32>
    %cst_25 = arith.constant 2.000000e+00 : f32
    %38 = vector.broadcast %cst_25 : f32 to vector<2x128xf32>
    %39 = arith.mulf %38, %37 : vector<2x128xf32>
    %cst_26 = arith.constant 1.000000e+00 : f32
    %40 = vector.broadcast %cst_26 : f32 to vector<2x128xf32>
    %41 = arith.subf %39, %40 : vector<2x128xf32>
    %c2 = arith.constant 2 : index
    %c0_27 = arith.constant 0 : index
    %c0_28 = arith.constant 0 : index
    %42 = vector.load %arg3[%c2, %c0_27, %c0_28] : memref<4x32x2xf32, #tpu.memory_space<vmem>>, vector<1x32x2xf32>
    %43 = vector.shape_cast %42 : vector<1x32x2xf32> to vector<32x2xf32>
    %cst_29 = arith.constant dense<0.000000e+00> : vector<32x128xf32>
    %44 = tpu.matmul %43, %36, %cst_29 {dimension_numbers = #tpu.dot_dimension_numbers<[1], [0], [0], [1], [0, 0, 1, 1], [], []>} : vector<32x2xf32>, vector<2x128xf32>, vector<32x128xf32> -> vector<32x128xf32>
    %45 = arith.addf %33, %44 : vector<32x128xf32>
    %c2_30 = arith.constant 2 : index
    %c0_31 = arith.constant 0 : index
    %c0_32 = arith.constant 0 : index
    %46 = vector.load %arg4[%c2_30, %c0_31, %c0_32] : memref<4x32x2xf32, #tpu.memory_space<vmem>>, vector<1x32x2xf32>
    %47 = vector.shape_cast %46 : vector<1x32x2xf32> to vector<32x2xf32>
    %cst_33 = arith.constant dense<0.000000e+00> : vector<32x128xf32>
    %48 = tpu.matmul %47, %41, %cst_33 {dimension_numbers = #tpu.dot_dimension_numbers<[1], [0], [0], [1], [0, 0, 1, 1], [], []>} : vector<32x2xf32>, vector<2x128xf32>, vector<32x128xf32> -> vector<32x128xf32>
    %49 = arith.addf %45, %48 : vector<32x128xf32>
    %cst_34 = arith.constant 2.000000e+00 : f32
    %50 = vector.broadcast %cst_34 : f32 to vector<2x128xf32>
    %51 = arith.mulf %50, %36 : vector<2x128xf32>
    %52 = arith.mulf %51, %41 : vector<2x128xf32>
    %53 = arith.mulf %41, %41 : vector<2x128xf32>
    %cst_35 = arith.constant 2.000000e+00 : f32
    %54 = vector.broadcast %cst_35 : f32 to vector<2x128xf32>
    %55 = arith.mulf %54, %53 : vector<2x128xf32>
    %cst_36 = arith.constant 1.000000e+00 : f32
    %56 = vector.broadcast %cst_36 : f32 to vector<2x128xf32>
    %57 = arith.subf %55, %56 : vector<2x128xf32>
    %c3 = arith.constant 3 : index
    %c0_37 = arith.constant 0 : index
    %c0_38 = arith.constant 0 : index
    %58 = vector.load %arg3[%c3, %c0_37, %c0_38] : memref<4x32x2xf32, #tpu.memory_space<vmem>>, vector<1x32x2xf32>
    %59 = vector.shape_cast %58 : vector<1x32x2xf32> to vector<32x2xf32>
    %cst_39 = arith.constant dense<0.000000e+00> : vector<32x128xf32>
    %60 = tpu.matmul %59, %52, %cst_39 {dimension_numbers = #tpu.dot_dimension_numbers<[1], [0], [0], [1], [0, 0, 1, 1], [], []>} : vector<32x2xf32>, vector<2x128xf32>, vector<32x128xf32> -> vector<32x128xf32>
    %61 = arith.addf %49, %60 : vector<32x128xf32>
    %c3_40 = arith.constant 3 : index
    %c0_41 = arith.constant 0 : index
    %c0_42 = arith.constant 0 : index
    %62 = vector.load %arg4[%c3_40, %c0_41, %c0_42] : memref<4x32x2xf32, #tpu.memory_space<vmem>>, vector<1x32x2xf32>
    %63 = vector.shape_cast %62 : vector<1x32x2xf32> to vector<32x2xf32>
    %cst_43 = arith.constant dense<0.000000e+00> : vector<32x128xf32>
    %64 = tpu.matmul %63, %57, %cst_43 {dimension_numbers = #tpu.dot_dimension_numbers<[1], [0], [0], [1], [0, 0, 1, 1], [], []>} : vector<32x2xf32>, vector<2x128xf32>, vector<32x128xf32> -> vector<32x128xf32>
    %65 = arith.addf %61, %64 : vector<32x128xf32>
    %66 = math.sin %65 : vector<32x128xf32>
    %c0_44 = arith.constant 0 : index
    %c0_45 = arith.constant 0 : index
    %67 = vector.load %arg6[%c0_44, %c0_45] : memref<32x32xf32, #tpu.memory_space<vmem>>, vector<32x32xf32>
    %cst_46 = arith.constant dense<0.000000e+00> : vector<32x128xf32>
    %68 = tpu.matmul %67, %66, %cst_46 {dimension_numbers = #tpu.dot_dimension_numbers<[1], [0], [0], [1], [0, 0, 1, 1], [], []>} : vector<32x32xf32>, vector<32x128xf32>, vector<32x128xf32> -> vector<32x128xf32>
    %c0_47 = arith.constant 0 : index
    %c0_48 = arith.constant 0 : index
    %69 = vector.load %arg7[%c0_47, %c0_48] : memref<32x1xf32, #tpu.memory_space<vmem>>, vector<32x1xf32>
    %70 = vector.broadcast %69 : vector<32x1xf32> to vector<32x128xf32>
    %71 = arith.addf %68, %70 : vector<32x128xf32>
    %72 = math.sin %71 : vector<32x128xf32>
    %c0_49 = arith.constant 0 : index
    %c0_50 = arith.constant 0 : index
    %73 = vector.load %arg8[%c0_49, %c0_50] : memref<2x32xf32, #tpu.memory_space<vmem>>, vector<2x32xf32>
    %cst_51 = arith.constant dense<0.000000e+00> : vector<2x128xf32>
    %74 = tpu.matmul %73, %72, %cst_51 {dimension_numbers = #tpu.dot_dimension_numbers<[1], [0], [0], [1], [0, 0, 1, 1], [], []>} : vector<2x32xf32>, vector<32x128xf32>, vector<2x128xf32> -> vector<2x128xf32>
    %c0_52 = arith.constant 0 : index
    %c0_53 = arith.constant 0 : index
    %75 = vector.load %arg9[%c0_52, %c0_53] : memref<2x1xf32, #tpu.memory_space<vmem>>, vector<2x1xf32>
    %76 = vector.broadcast %75 : vector<2x1xf32> to vector<2x128xf32>
    %77 = arith.addf %74, %76 : vector<2x128xf32>
    %c0_54 = arith.constant 0 : index
    %c0_55 = arith.constant 0 : index
    %78 = vector.load %arg10[%c0_54, %c0_55] : memref<2x128xf32, #tpu.memory_space<vmem>>, vector<2x128xf32>
    tpu.vector_store %arg10[%c0_54, %c0_55], %77 {strides = array<i32>} : memref<2x128xf32, #tpu.memory_space<vmem>>, vector<2x128xf32>,
    return
  }
  func.func @transform_0(%arg0: i32) -> (i32, i32) {
    %c0_i32 = arith.constant 0 : i32
    %c0_i32_0 = arith.constant 0 : i32
    return %c0_i32, %arg0 : i32, i32
  }
  func.func @transform_1(%arg0: i32) -> (i32, i32) {
    %c0_i32 = arith.constant 0 : i32
    %c0_i32_0 = arith.constant 0 : i32
    %c0_i32_1 = arith.constant 0 : i32
    return %c0_i32, %c0_i32_0 : i32, i32
  }
  func.func @transform_2(%arg0: i32) -> (i32, i32, i32) {
    %c0_i32 = arith.constant 0 : i32
    %c0_i32_0 = arith.constant 0 : i32
    %c0_i32_1 = arith.constant 0 : i32
    %c0_i32_2 = arith.constant 0 : i32
    return %c0_i32, %c0_i32_0, %c0_i32_1 : i32, i32, i32
  }
  func.func @transform_3(%arg0: i32) -> (i32, i32, i32) {
    %c0_i32 = arith.constant 0 : i32
    %c0_i32_0 = arith.constant 0 : i32
    %c0_i32_1 = arith.constant 0 : i32
    %c0_i32_2 = arith.constant 0 : i32
    return %c0_i32, %c0_i32_0, %c0_i32_1 : i32, i32, i32
  }
  func.func @transform_4(%arg0: i32) -> (i32, i32) {
    %c0_i32 = arith.constant 0 : i32
    %c0_i32_0 = arith.constant 0 : i32
    %c0_i32_1 = arith.constant 0 : i32
    return %c0_i32, %c0_i32_0 : i32, i32
  }
  func.func @transform_5(%arg0: i32) -> (i32, i32) {
    %c0_i32 = arith.constant 0 : i32
    %c0_i32_0 = arith.constant 0 : i32
    %c0_i32_1 = arith.constant 0 : i32
    return %c0_i32, %c0_i32_0 : i32, i32
  }
  func.func @transform_6(%arg0: i32) -> (i32, i32) {
    %c0_i32 = arith.constant 0 : i32
    %c0_i32_0 = arith.constant 0 : i32
    %c0_i32_1 = arith.constant 0 : i32
    return %c0_i32, %c0_i32_0 : i32, i32
  }
  func.func @transform_7(%arg0: i32) -> (i32, i32) {
    %c0_i32 = arith.constant 0 : i32
    %c0_i32_0 = arith.constant 0 : i32
    %c0_i32_1 = arith.constant 0 : i32
    return %c0_i32, %c0_i32_0 : i32, i32
  }
  func.func @transform_8(%arg0: i32) -> (i32, i32) {
    %c0_i32 = arith.constant 0 : i32
    %c0_i32_0 = arith.constant 0 : i32
    %c0_i32_1 = arith.constant 0 : i32
    return %c0_i32, %c0_i32_0 : i32, i32
  }
  func.func @transform_9(%arg0: i32) -> (i32, i32) {
    %c0_i32 = arith.constant 0 : i32
    %c0_i32_0 = arith.constant 0 : i32
    return %c0_i32, %arg0 : i32, i32
  }
}

</mosaic_0001>

<llo_original>
// kernel: tpu_custom_call.1
$region0: #{tpu_custom_call.1}
  #allocation0 [shape = 'u32[]', space=smem, size = 0x4, offset = 0x4, fixed_abs, tag = 'smem constant byte address 0x4 - core index']
  #allocation1 [shape = 'u32[144,128]{1,0:T(1,128)}', space=vmem, size = 0x12000, scoped, tag = 'internal scratch']
  %s0 = inlined_call_operand.vmem [shape: f32[2,256], index: 0, kind: input, shape index: {}]
  %s1 = inlined_call_operand.vmem [shape: f32[32,2], index: 1, kind: input, shape index: {}]
  %s2 = inlined_call_operand.vmem [shape: f32[4,32,2], index: 2, kind: input, shape index: {}]
  %s3 = inlined_call_operand.vmem [shape: f32[4,32,2], index: 3, kind: input, shape index: {}]
  %s4 = inlined_call_operand.vmem [shape: f32[32,1], index: 4, kind: input, shape index: {}]
  %s5 = inlined_call_operand.vmem [shape: f32[32,32], index: 5, kind: input, shape index: {}]
  %s6 = inlined_call_operand.vmem [shape: f32[32,1], index: 6, kind: input, shape index: {}]
  %s7 = inlined_call_operand.vmem [shape: f32[2,32], index: 7, kind: input, shape index: {}]
  %s8 = inlined_call_operand.vmem [shape: f32[2,1], index: 8, kind: input, shape index: {}]
  %s9 = inlined_call_operand.hbm [shape: f32[2,256], index: 9, kind: output, shape index: {}]
  %s10 = sld [smem:[#allocation0]]
  $region69: #{tpu_custom_call.1} parent=0
    _
  %s12 = ssub.s32 1, %s10
  %s13 = scalar_select 0, %s12, %s10
  $region1: #{tpu_custom_call.1} parent=0
    #allocation2 [shape = 'u8[2048]{0}', space=vmem, size = 0x800, scoped, tag = 'output window, operand 0']
    #allocation3 [shape = 's32[2]{0}', space=sflag, size = 0x8, scoped, tag = 'scoped memory for tpu_custom_call.1']
    %14 = vsyncpa [#allocation3], 0
    %s15 = scalar_lea.sflag [#allocation3], 1
    %16 = vsyncpa %s15, 0
    loop: start=0, step=1, limit=4
    $region2: #{tpu_custom_call.1} parent=1 // loop_pre_header
      _
    $region3: #{tpu_custom_call.1} parent=1 // loop_header
      %s18 = sphi 0, %s22
      %p19 = scmp.ge.s32.totalorder %s18, 4
      %s28 = sphi 0, %s30
      %s31 = sphi 0, %s28
      %s32 = sphi 0, %s31
      %s48 = sphi 0, %s32
      %s52 = sphi 0, %s52
      %s54 = sphi 0, %s52
      %s55 = sphi 0, %s54
      %s69 = sphi 0, %s55
      %s73 = sphi 0, %s73
      %s75 = sphi 0, %s73
      %s76 = sphi 0, %s75
      %s90 = sphi 0, %s76
      %s94 = sphi 0, %s94
      %s96 = sphi 0, %s94
      %s97 = sphi 0, %s96
      %s111 = sphi 0, %s97
      %s115 = sphi 0, %s115
      %s117 = sphi 0, %s115
      %s118 = sphi 0, %s117
      %s132 = sphi 0, %s118
      %s136 = sphi 0, %s136
      %s138 = sphi 0, %s136
      %s139 = sphi 0, %s138
      %s153 = sphi 0, %s139
      %s157 = sphi 0, %s157
      %s159 = sphi 0, %s157
      %s160 = sphi 0, %s159
      %s174 = sphi 0, %s160
      %s178 = sphi 0, %s178
      %s180 = sphi 0, %s178
      %s181 = sphi 0, %s180
      %s195 = sphi 0, %s181
      %s199 = sphi 0, %s199
      %s201 = sphi 0, %s199
      %s202 = sphi 0, %s201
      %s216 = sphi 0, %s202
      %s222 = sphi 0, %s224
      %s225 = sphi 0, %s222
      %s226 = sphi 0, %s225
      %s242 = sphi 0, %s226
    $region4: #{tpu_custom_call.1} parent=1 // loop_header_branch
      %21 = sbr.rel (%p19) target = $region8
    $region5: #{tpu_custom_call.1} parent=1 // loop_body
      %s23 = ssub.s32 %s18, 1
      %s24 = ssub.s32 %s18, 2
      %s25 = sadd.s32 %s18, 1
      %s26 = ssub.s32 %s18, %s25
      %p27 = scmp.eq.s32.totalorder %s26, 0
      %s29 = sadd.s32 %s28, 1
      %s30 = scalar_select %p27, %s28, %s29
      %p33 = pneg %p27
      %p34 = scmp.eq.s32.totalorder %s18, 1
      %p35 = por %p33, %p34
      %p36 = scmp.ne.s32.totalorder %s28, %s31
      %p37 = scmp.eq.s32.totalorder %s18, 0
      %p38 = por %p36, %p37
      %p39 = scmp.ne.s32.totalorder %s28, %s31
      %p40 = scmp.eq.s32.totalorder %s23, 1
      %p41 = por %p39, %p40
      %p42 = scmp.ne.s32.totalorder %s31, %s32
      %p43 = scmp.eq.s32.totalorder %s23, 0
      %p44 = por %p42, %p43
      %p45 = scmp.ne.s32.totalorder %s31, %s32
      %p46 = scmp.eq.s32.totalorder %s24, 1
      %p47 = por %p45, %p46
      %p49 = scmp.ne.s32.totalorder %s32, %s48
      %p50 = scmp.eq.s32.totalorder %s24, 0
      %p51 = por %p49, %p50
      %s53 = sadd.s32 %s52, 1
      %p56 = scmp.eq.s32.totalorder %s18, 1
      %p57 = scmp.ne.s32.totalorder %s52, %s54
      %p58 = scmp.eq.s32.totalorder %s18, 0
      %p59 = por %p57, %p58
      %p60 = scmp.ne.s32.totalorder %s52, %s54
      %p61 = scmp.eq.s32.totalorder %s23, 1
      %p62 = por %p60, %p61
      %p63 = scmp.ne.s32.totalorder %s54, %s55
      %p64 = scmp.eq.s32.totalorder %s23, 0
      %p65 = por %p63, %p64
      %p66 = scmp.ne.s32.totalorder %s54, %s55
      %p67 = scmp.eq.s32.totalorder %s24, 1
      %p68 = por %p66, %p67
      %p70 = scmp.ne.s32.totalorder %s55, %s69
      %p71 = scmp.eq.s32.totalorder %s24, 0
      %p72 = por %p70, %p71
      %s74 = sadd.s32 %s73, 1
      %p77 = scmp.eq.s32.totalorder %s18, 1
      %p78 = scmp.ne.s32.totalorder %s73, %s75
      %p79 = scmp.eq.s32.totalorder %s18, 0
      %p80 = por %p78, %p79
      %p81 = scmp.ne.s32.totalorder %s73, %s75
      %p82 = scmp.eq.s32.totalorder %s23, 1
      %p83 = por %p81, %p82
      %p84 = scmp.ne.s32.totalorder %s75, %s76
      %p85 = scmp.eq.s32.totalorder %s23, 0
      %p86 = por %p84, %p85
      %p87 = scmp.ne.s32.totalorder %s75, %s76
      %p88 = scmp.eq.s32.totalorder %s24, 1
      %p89 = por %p87, %p88
      %p91 = scmp.ne.s32.totalorder %s76, %s90
      %p92 = scmp.eq.s32.totalorder %s24, 0
      %p93 = por %p91, %p92
      %s95 = sadd.s32 %s94, 1
      %p98 = scmp.eq.s32.totalorder %s18, 1
      %p99 = scmp.ne.s32.totalorder %s94, %s96
      %p100 = scmp.eq.s32.totalorder %s18, 0
      %p101 = por %p99, %p100
      %p102 = scmp.ne.s32.totalorder %s94, %s96
      %p103 = scmp.eq.s32.totalorder %s23, 1
      %p104 = por %p102, %p103
      %p105 = scmp.ne.s32.totalorder %s96, %s97
      %p106 = scmp.eq.s32.totalorder %s23, 0
      %p107 = por %p105, %p106
      %p108 = scmp.ne.s32.totalorder %s96, %s97
      %p109 = scmp.eq.s32.totalorder %s24, 1
      %p110 = por %p108, %p109
      %p112 = scmp.ne.s32.totalorder %s97, %s111
      %p113 = scmp.eq.s32.totalorder %s24, 0
      %p114 = por %p112, %p113
      %s116 = sadd.s32 %s115, 1
      %p119 = scmp.eq.s32.totalorder %s18, 1
      %p120 = scmp.ne.s32.totalorder %s115, %s117
      %p121 = scmp.eq.s32.totalorder %s18, 0
      %p122 = por %p120, %p121
      %p123 = scmp.ne.s32.totalorder %s115, %s117
      %p124 = scmp.eq.s32.totalorder %s23, 1
      %p125 = por %p123, %p124
      %p126 = scmp.ne.s32.totalorder %s117, %s118
      %p127 = scmp.eq.s32.totalorder %s23, 0
      %p128 = por %p126, %p127
      %p129 = scmp.ne.s32.totalorder %s117, %s118
      %p130 = scmp.eq.s32.totalorder %s24, 1
      %p131 = por %p129, %p130
      %p133 = scmp.ne.s32.totalorder %s118, %s132
      %p134 = scmp.eq.s32.totalorder %s24, 0
      %p135 = por %p133, %p134
      %s137 = sadd.s32 %s136, 1
      %p140 = scmp.eq.s32.totalorder %s18, 1
      %p141 = scmp.ne.s32.totalorder %s136, %s138
      %p142 = scmp.eq.s32.totalorder %s18, 0
      %p143 = por %p141, %p142
      %p144 = scmp.ne.s32.totalorder %s136, %s138
      %p145 = scmp.eq.s32.totalorder %s23, 1
      %p146 = por %p144, %p145
      %p147 = scmp.ne.s32.totalorder %s138, %s139
      %p148 = scmp.eq.s32.totalorder %s23, 0
      %p149 = por %p147, %p148
      %p150 = scmp.ne.s32.totalorder %s138, %s139
      %p151 = scmp.eq.s32.totalorder %s24, 1
      %p152 = por %p150, %p151
      %p154 = scmp.ne.s32.totalorder %s139, %s153
      %p155 = scmp.eq.s32.totalorder %s24, 0
      %p156 = por %p154, %p155
      %s158 = sadd.s32 %s157, 1
      %p161 = scmp.eq.s32.totalorder %s18, 1
      %p162 = scmp.ne.s32.totalorder %s157, %s159
      %p163 = scmp.eq.s32.totalorder %s18, 0
      %p164 = por %p162, %p163
      %p165 = scmp.ne.s32.totalorder %s157, %s159
      %p166 = scmp.eq.s32.totalorder %s23, 1
      %p167 = por %p165, %p166
      %p168 = scmp.ne.s32.totalorder %s159, %s160
      %p169 = scmp.eq.s32.totalorder %s23, 0
      %p170 = por %p168, %p169
      %p171 = scmp.ne.s32.totalorder %s159, %s160
      %p172 = scmp.eq.s32.totalorder %s24, 1
      %p173 = por %p171, %p172
      %p175 = scmp.ne.s32.totalorder %s160, %s174
      %p176 = scmp.eq.s32.totalorder %s24, 0
      %p177 = por %p175, %p176
      %s179 = sadd.s32 %s178, 1
      %p182 = scmp.eq.s32.totalorder %s18, 1
      %p183 = scmp.ne.s32.totalorder %s178, %s180
      %p184 = scmp.eq.s32.totalorder %s18, 0
      %p185 = por %p183, %p184
      %p186 = scmp.ne.s32.totalorder %s178, %s180
      %p187 = scmp.eq.s32.totalorder %s23, 1
      %p188 = por %p186, %p187
      %p189 = scmp.ne.s32.totalorder %s180, %s181
      %p190 = scmp.eq.s32.totalorder %s23, 0
      %p191 = por %p189, %p190
      %p192 = scmp.ne.s32.totalorder %s180, %s181
      %p193 = scmp.eq.s32.totalorder %s24, 1
      %p194 = por %p192, %p193
      %p196 = scmp.ne.s32.totalorder %s181, %s195
      %p197 = scmp.eq.s32.totalorder %s24, 0
      %p198 = por %p196, %p197
      %s200 = sadd.s32 %s199, 1
      %p203 = scmp.eq.s32.totalorder %s18, 1
      %p204 = scmp.ne.s32.totalorder %s199, %s201
      %p205 = scmp.eq.s32.totalorder %s18, 0
      %p206 = por %p204, %p205
      %p207 = scmp.ne.s32.totalorder %s199, %s201
      %p208 = scmp.eq.s32.totalorder %s23, 1
      %p209 = por %p207, %p208
      %p210 = scmp.ne.s32.totalorder %s201, %s202
      %p211 = scmp.eq.s32.totalorder %s23, 0
      %p212 = por %p210, %p211
      %p213 = scmp.ne.s32.totalorder %s201, %s202
      %p214 = scmp.eq.s32.totalorder %s24, 1
      %p215 = por %p213, %p214
      %p217 = scmp.ne.s32.totalorder %s202, %s216
      %p218 = scmp.eq.s32.totalorder %s24, 0
      %p219 = por %p217, %p218
      %s220 = ssub.s32 %s18, %s25
      %p221 = scmp.eq.s32.totalorder %s220, 0
      %s223 = sadd.s32 %s222, 1
      %s224 = scalar_select %p221, %s222, %s223
      %p227 = pneg %p221
      %p228 = scmp.eq.s32.totalorder %s18, 1
      %p229 = por %p227, %p228
      %p230 = scmp.ne.s32.totalorder %s222, %s225
      %p231 = scmp.eq.s32.totalorder %s18, 0
      %p232 = por %p230, %p231
      %p233 = scmp.ne.s32.totalorder %s222, %s225
      %p234 = scmp.eq.s32.totalorder %s23, 1
      %p235 = por %p233, %p234
      %p236 = scmp.ne.s32.totalorder %s225, %s226
      %p237 = scmp.eq.s32.totalorder %s23, 0
      %p238 = por %p236, %p237
      %p239 = scmp.ne.s32.totalorder %s225, %s226
      %p240 = scmp.eq.s32.totalorder %s24, 1
      %p241 = por %p239, %p240
      %p243 = scmp.ne.s32.totalorder %s226, %s242
      %p244 = scmp.eq.s32.totalorder %s24, 0
      %p245 = por %p243, %p244
      %p246 = scmp.le.s32.totalorder 1, %s18
      %p247 = scmp.lt.s32.totalorder %s18, 3
      %p248 = pnand %p246, %p247
      %p249 = pneg %p248
      // Predicated region
      $region9: #{tpu_custom_call.1} parent=5 // pred_check
        _
      $region10: #{tpu_custom_call.1} parent=5 // pred_check_branch
        %251 = sbr.rel (%p248) target = $region12
      $region11: #{tpu_custom_call.1} parent=5 // pred_region
        %s252 = ssub.s32 %s18, 1
        // Predicated region
        $region13: #{tpu_custom_call.1} parent=11 // pred_check
          %p253 = pneg %p65
        $region14: #{tpu_custom_call.1} parent=11 // pred_check_branch
          %255 = sbr.rel (%p253) target = $region16
        $region15: #{tpu_custom_call.1} parent=11 // pred_region
          _
        $region16: #{tpu_custom_call.1} parent=11 // pred_fallthru
          _
        // Predicated region
        $region17: #{tpu_custom_call.1} parent=11 // pred_check
          %p256 = pneg %p86
        $region18: #{tpu_custom_call.1} parent=11 // pred_check_branch
          %258 = sbr.rel (%p256) target = $region20
        $region19: #{tpu_custom_call.1} parent=11 // pred_region
          _
        $region20: #{tpu_custom_call.1} parent=11 // pred_fallthru
          _
        // Predicated region
        $region21: #{tpu_custom_call.1} parent=11 // pred_check
          %p259 = pneg %p107
        $region22: #{tpu_custom_call.1} parent=11 // pred_check_branch
          %261 = sbr.rel (%p259) target = $region24
        $region23: #{tpu_custom_call.1} parent=11 // pred_region
          _
        $region24: #{tpu_custom_call.1} parent=11 // pred_fallthru
          _
        // Predicated region
        $region25: #{tpu_custom_call.1} parent=11 // pred_check
          %p262 = pneg %p128
        $region26: #{tpu_custom_call.1} parent=11 // pred_check_branch
          %264 = sbr.rel (%p262) target = $region28
        $region27: #{tpu_custom_call.1} parent=11 // pred_region
          _
        $region28: #{tpu_custom_call.1} parent=11 // pred_fallthru
          _
        // Predicated region
        $region29: #{tpu_custom_call.1} parent=11 // pred_check
          %p265 = pneg %p149
        $region30: #{tpu_custom_call.1} parent=11 // pred_check_branch
          %267 = sbr.rel (%p265) target = $region32
        $region31: #{tpu_custom_call.1} parent=11 // pred_region
          _
        $region32: #{tpu_custom_call.1} parent=11 // pred_fallthru
          _
        // Predicated region
        $region33: #{tpu_custom_call.1} parent=11 // pred_check
          %p268 = pneg %p170
        $region34: #{tpu_custom_call.1} parent=11 // pred_check_branch
          %270 = sbr.rel (%p268) target = $region36
        $region35: #{tpu_custom_call.1} parent=11 // pred_region
          _
        $region36: #{tpu_custom_call.1} parent=11 // pred_fallthru
          _
        // Predicated region
        $region37: #{tpu_custom_call.1} parent=11 // pred_check
          %p271 = pneg %p191
        $region38: #{tpu_custom_call.1} parent=11 // pred_check_branch
          %273 = sbr.rel (%p271) target = $region40
        $region39: #{tpu_custom_call.1} parent=11 // pred_region
          _
        $region40: #{tpu_custom_call.1} parent=11 // pred_fallthru
          _
        // Predicated region
        $region41: #{tpu_custom_call.1} parent=11 // pred_check
          %p274 = pneg %p212
        $region42: #{tpu_custom_call.1} parent=11 // pred_check_branch
          %276 = sbr.rel (%p274) target = $region44
        $region43: #{tpu_custom_call.1} parent=11 // pred_region
          _
        $region44: #{tpu_custom_call.1} parent=11 // pred_fallthru
          _
      $region12: #{tpu_custom_call.1} parent=5 // pred_fallthru
        _
      %p277 = scmp.lt.s32.totalorder %s18, 2
      // Predicated region
      $region45: #{tpu_custom_call.1} parent=5 // pred_check
        %p278 = pneg %p277
      $region46: #{tpu_custom_call.1} parent=5 // pred_check_branch
        %280 = sbr.rel (%p278) target = $region48
      $region47: #{tpu_custom_call.1} parent=5 // pred_region
        // Predicated region
        $region49: #{tpu_custom_call.1} parent=47 // pred_check
          %p281 = pneg %p38
        $region50: #{tpu_custom_call.1} parent=47 // pred_check_branch
          %283 = sbr.rel (%p281) target = $region52
        $region51: #{tpu_custom_call.1} parent=47 // pred_region
          %p284 = scmp.lt.s32.totalorder %s18, 1
          %s285 = scalar_select %p284, %s18, 1
          %s286 = smul.addr %s285, 2
          %s287 = scalar_lea.vmem %s0, %s286
        $region52: #{tpu_custom_call.1} parent=47 // pred_fallthru
          _
      $region48: #{tpu_custom_call.1} parent=5 // pred_fallthru
        _
      %p288 = scmp.le.s32.totalorder 1, %s18
      %p289 = scmp.lt.s32.totalorder %s18, 3
      %p290 = pnand %p288, %p289
      %p291 = pneg %p290
      // Predicated region
      $region53: #{tpu_custom_call.1} parent=5 // pred_check
        _
      $region54: #{tpu_custom_call.1} parent=5 // pred_check_branch
        %293 = sbr.rel (%p290) target = $region56
      $region55: #{tpu_custom_call.1} parent=5 // pred_region
        %s294 = ssub.s32 %s18, 1
        %p295 = scmp.lt.s32.totalorder %s23, 1
        %s296 = scalar_select %p295, %s23, 1
        %s297 = smul.addr %s296, 2
        %s298 = scalar_lea.vmem %s0, %s297
        %p299 = pneg %p44
        %p300 = pneg %p41
        %p301 = pneg %p65
        %p302 = pneg %p62
        %p303 = pneg %p86
        %p304 = pneg %p83
        %p305 = pneg %p107
        %p306 = pneg %p104
        %p307 = pneg %p128
        %p308 = pneg %p125
        %p309 = pneg %p149
        %p310 = pneg %p146
        %p311 = pneg %p170
        %p312 = pneg %p167
        %p313 = pneg %p191
        %p314 = pneg %p188
        %p315 = pneg %p212
        %p316 = pneg %p209
        %p317 = pneg %p238
        %p318 = pneg %p235
        %s319 = sand.u32 %s225, 1
        %s320 = scalar_lea.sflag [#allocation3], %s319
        %s321 = sand.u32 %s225, 1
        %s322 = smul.addr %s321, 2
        %s323 = scalar_lea.vmem [#allocation2], %s322
        %p324 = scmp.lt.s32.totalorder %s23, 1
        %s325 = scalar_select %p324, %s23, 1
        %s326 = smul.addr %s325, 2
        %s327 = scalar_lea.vmem %s0, %s326
        %v328 = vld [vmem:[%s327] sm:$0x3]
        %v329 = vmul.f32 %v328, 3.1415927
        %v330 = vand.u32 2147483647, %v329
        %vm331 = vcmp.le.f32.partialorder %v330, 0.7853982
        %vm332 = vcmp.lt.s32.totalorder %v329, 0
        %v333 = vand.u32 %v329, 2139095040
        %v334 = vshrl.u32 %v333, 23
        %v335 = vsub.s32 %v334, 127
        %v336 = vand.u32 2147483647, %v329
        %v337 = vand.u32 %v336, 8388607
        %v338 = vor.u32 %v337, 8388608
        %v339 = vsub.s32 0, %v338
        %v340 = vadd.s32 %v335, 1
        %vm341 = vcmp.gt.s32.totalorder %v340, 0
        %v342 = vsel %vm341, %v340, 0
        %v343 = vshrl.u32 %v342, 5
        %v344 = vand.u32 %v342, 31
        %v345 = vsub.s32 32, %v344
        %v346 = vshrl.u32 683565275, %v345
        %v347 = vshll.u32 683565275, %v344
        %v348 = vshrl.u32 2475754826, %v345
        %v349 = vor.u32 %v347, %v348
        %v350 = vshll.u32 2475754826, %v344
        %v351 = vshrl.u32 2131351028, %v345
        %v352 = vor.u32 %v350, %v351
        %v353 = vshll.u32 2131351028, %v344
        %v354 = vshrl.u32 2102212464, %v345
        %v355 = vor.u32 %v353, %v354
        %v356 = vshll.u32 2102212464, %v344
        %v357 = vshrl.u32 920167782, %v345
        %v358 = vor.u32 %v356, %v357
        %v359 = vshll.u32 920167782, %v344
        %v360 = vshrl.u32 1326507024, %v345
        %v361 = vor.u32 %v359, %v360
        %vm362 = vcmp.lt.s32.totalorder %v343, 1
        %vm363 = vcmp.lt.s32.totalorder %v343, 2
        %vm364 = vcmp.lt.s32.totalorder %v343, 3
        %vm365 = vcmp.lt.s32.totalorder %v343, 4
        %v366 = vsel %vm362, %v346, %v349
        %v367 = vsel %vm365, %v355, 2102212464
        %v368 = vsel %vm364, %v352, %v367
        %v369 = vsel %vm363, %v366, %v368
        %v370 = vsel %vm362, %v349, %v352
        %v371 = vsel %vm365, %v358, 920167782
        %v372 = vsel %vm364, %v355, %v371
        %v373 = vsel %vm363, %v370, %v372
        %v374 = vsel %vm362, %v352, %v355
        %v375 = vsel %vm365, %v361, 1326507024
        %v376 = vsel %vm364, %v358, %v375
        %v377 = vsel %vm363, %v374, %v376
        %v378 = vshll.u32 %v338, 8
        %v379 = vmul.u32.u64.compose %v378, %v377
        %v380 = vextract.low.u32 %v379
        %v381 = vextract.high.u32 %v379
        %v382 = vmul.u32.u64.compose %v378, %v373
        %v383 = vextract.low.u32 %v382
        %v384 = vextract.high.u32 %v382
        %v385 = vmul.u32 %v378, %v369
        %v386 = vadd.s32 %v381, %v383
        %vm387 = vc.u32 %v381, %v383
        %v388 = vadd.s32 %v384, 1
        %v389 = vsel %vm387, %v388, %v384
        %v390 = vadd.s32 %v385, %v389
        %v391 = vadd.s32 %v390, 536870912
        %v392 = vshrl.u32 %v391, 30
        %v393 = vshll.u32 %v392, 30
        %v394 = vsub.s32 %v390, %v393
        %vm395 = vcmp.lt.s32.totalorder %v394, 0
        %v396 = vsub.s32 0, %v394
        %v397 = vsel %vm395, %v396, %v394
        %v398 = vclz %v397
        %v399 = vsub.s32 %v398, 2
        %vm400 = vcmp.gt.s32.totalorder 0, %v399
        %v401 = vsel %vm400, 0, %v399
        %v402 = vsub.s32 32, %v401
        %v403 = vshll.u32 %v394, %v401
        %v404 = vshrl.u32 %v386, %v402
        %v405 = vor.u32 %v403, %v404
        %v406 = vsub.s32 4294967266, %v401
        %v407 = vadd.s32 %v406, 127
        %v408 = vshll.u32 %v407, 23
        %v409 = vor.u32 4788187, %v408
        %v410 = vand.u32 2147483647, %v409
        %v412 = vcvt.s32.f32 %v405
        %v413 = vmul.f32 %v412, %v410
        %v414 = vxor.u32 %v413, 2147483648
        %v415 = vsel %vm332, %v414, %v413
        %v416 = vsub.s32 4, %v392
        %v417 = vsel %vm332, %v416, %v392
        %v418 = vsel %vm331, %v329, %v415
        %v419 = vsel %vm331, 0, %v417
        %v420 = vcosq.f32.pop %v418
        %v421 = vsinq.f32.pop %v418
        %vm422 = vweird.f32 %v329
        %v423 = vadd.s32 %v419, 3
        %v424 = vand.u32 %v423, 3
        %vm425 = vcmp.lt.s32.totalorder %v424, 2
        %vm426 = vcmp.eq.s32.totalorder %v424, 0
        %v427 = vxor.u32 %v421, 2147483648
        %v428 = vsel %vm426, %v420, %v427
        %vm429 = vcmp.eq.s32.totalorder %v424, 2
        %v430 = vxor.u32 %v420, 2147483648
        %v431 = vsel %vm429, %v430, %v421
        %v432 = vsel %vm425, %v428, %v431
        %v433 = vsel %vm422, nan, %v432
        %v434 = vand.u32 2147483647, %v329
        %vm435 = vcmp.le.f32.partialorder %v434, 0.7853982
        %vm436 = vcmp.lt.s32.totalorder %v329, 0
        %v437 = vand.u32 %v329, 2139095040
        %v438 = vshrl.u32 %v437, 23
        %v439 = vsub.s32 %v438, 127
        %v440 = vand.u32 2147483647, %v329
        %v441 = vand.u32 %v440, 8388607
        %v442 = vor.u32 %v441, 8388608
        %v443 = vsub.s32 0, %v442
        %v444 = vadd.s32 %v439, 1
        %vm445 = vcmp.gt.s32.totalorder %v444, 0
        %v446 = vsel %vm445, %v444, 0
        %v447 = vshrl.u32 %v446, 5
        %v448 = vand.u32 %v446, 31
        %v449 = vsub.s32 32, %v448
        %v450 = vshrl.u32 683565275, %v449
        %v451 = vshll.u32 683565275, %v448
        %v452 = vshrl.u32 2475754826, %v449
        %v453 = vor.u32 %v451, %v452
        %v454 = vshll.u32 2475754826, %v448
        %v455 = vshrl.u32 2131351028, %v449
        %v456 = vor.u32 %v454, %v455
        %v457 = vshll.u32 2131351028, %v448
        %v458 = vshrl.u32 2102212464, %v449
        %v459 = vor.u32 %v457, %v458
        %v460 = vshll.u32 2102212464, %v448
        %v461 = vshrl.u32 920167782, %v449
        %v462 = vor.u32 %v460, %v461
        %v463 = vshll.u32 920167782, %v448
        %v464 = vshrl.u32 1326507024, %v449
        %v465 = vor.u32 %v463, %v464
        %vm466 = vcmp.lt.s32.totalorder %v447, 1
        %vm467 = vcmp.lt.s32.totalorder %v447, 2
        %vm468 = vcmp.lt.s32.totalorder %v447, 3
        %vm469 = vcmp.lt.s32.totalorder %v447, 4
        %v470 = vsel %vm466, %v450, %v453
        %v471 = vsel %vm469, %v459, 2102212464
        %v472 = vsel %vm468, %v456, %v471
        %v473 = vsel %vm467, %v470, %v472
        %v474 = vsel %vm466, %v453, %v456
        %v475 = vsel %vm469, %v462, 920167782
        %v476 = vsel %vm468, %v459, %v475
        %v477 = vsel %vm467, %v474, %v476
        %v478 = vsel %vm466, %v456, %v459
        %v479 = vsel %vm469, %v465, 1326507024
        %v480 = vsel %vm468, %v462, %v479
        %v481 = vsel %vm467, %v478, %v480
        %v482 = vshll.u32 %v442, 8
        %v483 = vmul.u32.u64.compose %v482, %v481
        %v484 = vextract.low.u32 %v483
        %v485 = vextract.high.u32 %v483
        %v486 = vmul.u32.u64.compose %v482, %v477
        %v487 = vextract.low.u32 %v486
        %v488 = vextract.high.u32 %v486
        %v489 = vmul.u32 %v482, %v473
        %v490 = vadd.s32 %v485, %v487
        %vm491 = vc.u32 %v485, %v487
        %v492 = vadd.s32 %v488, 1
        %v493 = vsel %vm491, %v492, %v488
        %v494 = vadd.s32 %v489, %v493
        %v495 = vadd.s32 %v494, 536870912
        %v496 = vshrl.u32 %v495, 30
        %v497 = vshll.u32 %v496, 30
        %v498 = vsub.s32 %v494, %v497
        %vm499 = vcmp.lt.s32.totalorder %v498, 0
        %v500 = vsub.s32 0, %v498
        %v501 = vsel %vm499, %v500, %v498
        %v502 = vclz %v501
        %v503 = vsub.s32 %v502, 2
        %vm504 = vcmp.gt.s32.totalorder 0, %v503
        %v505 = vsel %vm504, 0, %v503
        %v506 = vsub.s32 32, %v505
        %v507 = vshll.u32 %v498, %v505
        %v508 = vshrl.u32 %v490, %v506
        %v509 = vor.u32 %v507, %v508
        %v510 = vsub.s32 4294967266, %v505
        %v511 = vadd.s32 %v510, 127
        %v512 = vshll.u32 %v511, 23
        %v513 = vor.u32 4788187, %v512
        %v514 = vand.u32 2147483647, %v513
        %v516 = vcvt.s32.f32 %v509
        %v517 = vmul.f32 %v516, %v514
        %v518 = vxor.u32 %v517, 2147483648
        %v519 = vsel %vm436, %v518, %v517
        %v520 = vsub.s32 4, %v496
        %v521 = vsel %vm436, %v520, %v496
        %v522 = vsel %vm435, %v329, %v519
        %v523 = vsel %vm435, 0, %v521
        %v524 = vcosq.f32.pop %v522
        %v525 = vsinq.f32.pop %v522
        %vm526 = vweird.f32 %v329
        %v527 = vand.u32 %v523, 3
        %vm528 = vcmp.lt.s32.totalorder %v527, 2
        %vm529 = vcmp.eq.s32.totalorder %v527, 0
        %v530 = vxor.u32 %v525, 2147483648
        %v531 = vsel %vm529, %v524, %v530
        %vm532 = vcmp.eq.s32.totalorder %v527, 2
        %v533 = vxor.u32 %v524, 2147483648
        %v534 = vsel %vm532, %v533, %v525
        %v535 = vsel %vm528, %v531, %v534
        %v536 = vsel %vm526, nan, %v535
        %v537 = vld [vmem:[%s1] sm:$0xff]
        %v538 = vld [vmem:[%s1 + $0x8] sm:$0xff]
        %v539 = vld [vmem:[%s1 + $0x10] sm:$0xff]
        %v540 = vld [vmem:[%s1 + $0x18] sm:$0xff]
        %v541 = vld [vmem:[%s4] sm:$0xff]
        %v542 = vld [vmem:[%s4 + $0x8] sm:$0xff]
        %v543 = vld [vmem:[%s4 + $0x10] sm:$0xff]
        %v544 = vld [vmem:[%s4 + $0x18] sm:$0xff]
        %546 = vset.pattern.permute.xlu0 0
        %547 = vperm.xlu0 %546, %v541
        %v548 = vpop.permute.xlu0 %547
        %551 = vset.pattern.permute.xlu0 0
        %552 = vperm.xlu0 %551, %v542
        %v553 = vpop.permute.xlu0 %552
        %556 = vset.pattern.permute.xlu0 0
        %557 = vperm.xlu0 %556, %v543
        %v558 = vpop.permute.xlu0 %557
        %561 = vset.pattern.permute.xlu0 0
        %562 = vperm.xlu0 %561, %v544
        %v563 = vpop.permute.xlu0 %562
        %vm565 = vcmask 15360
        %v567 = vsel %vm565, %v537, 0
        %v570 = vsel %vm565, %v538, 0
        %v573 = vsel %vm565, %v539, 0
        %v576 = vsel %vm565, %v540, 0
        %vm578 = vcmask 1041408
        %v580 = vsel %vm578, %v328, 0
        %582 = vmatprep.subr.mxu0 0.0
        %583 = vmatpush1.msra.mxu0 %v580
        %584 = vmatprep.subr.mxu0 0.0
        %585 = vmatpush1.msra.mxu0 0.0
        %586 = vmatprep.subr.mxu0 0.0
        %587 = vmatpush1.msra.mxu0 0.0
        %588 = vmatprep.subr.mxu0 0.0
        %589 = vmatpush1.msra.mxu0 0.0
        %590 = vmatprep.subr.mxu0 0.0
        %591 = vmatpush1.msra.mxu0 0.0
        %592 = vmatprep.subr.mxu0 0.0
        %593 = vmatpush1.msra.mxu0 0.0
        %594 = vmatprep.subr.mxu0 0.0
        %595 = vmatpush1.msra.mxu0 0.0
        %596 = vmatprep.subr.mxu0 0.0
        %597 = vmatpush1.msra.mxu0 0.0
        %598 = vmatprep.subr.mxu0 0.0
        %599 = vmatpush1.msra.mxu0 0.0
        %600 = vmatprep.subr.mxu0 0.0
        %601 = vmatpush1.msra.mxu0 0.0
        %602 = vmatprep.subr.mxu0 0.0
        %603 = vmatpush1.msra.mxu0 0.0
        %604 = vmatprep.subr.mxu0 0.0
        %605 = vmatpush1.msra.mxu0 0.0
        %606 = vmatprep.subr.mxu0 0.0
        %607 = vmatpush1.msra.mxu0 0.0
        %608 = vmatprep.subr.mxu0 0.0
        %609 = vmatpush1.msra.mxu0 0.0
        %610 = vmatprep.subr.mxu0 0.0
        %611 = vmatpush1.msra.mxu0 0.0
        %612 = vmatprep.subr.mxu0 0.0
        %613 = vmatpush1.msra.mxu0 0.0
        %614 = vmatprep.subr.mxu0 0.0
        %615 = vmatpush1.msra.mxu0 0.0
        %616 = vmatprep.subr.mxu0 0.0
        %617 = vmatpush1.msra.mxu0 0.0
        %618 = vmatprep.subr.mxu0 0.0
        %619 = vmatpush1.msra.mxu0 0.0
        %620 = vmatprep.subr.mxu0 0.0
        %621 = vmatpush1.msra.mxu0 0.0
        %622 = vmatprep.subr.mxu0 0.0
        %623 = vmatpush1.msra.mxu0 0.0
        %624 = vmatprep.subr.mxu0 0.0
        %625 = vmatpush1.msra.mxu0 0.0
        %626 = vmatprep.subr.mxu0 0.0
        %627 = vmatpush1.msra.mxu0 0.0
        %628 = vmatprep.subr.mxu0 0.0
        %629 = vmatpush1.msra.mxu0 0.0
        %630 = vmatprep.subr.mxu0 0.0
        %631 = vmatpush1.msra.mxu0 0.0
        %632 = vmatprep.subr.mxu0 0.0
        %633 = vmatpush1.msra.mxu0 0.0
        %634 = vmatprep.subr.mxu0 0.0
        %635 = vmatpush1.msra.mxu0 0.0
        %636 = vmatprep.subr.mxu0 0.0
        %637 = vmatpush1.msra.mxu0 0.0
        %638 = vmatprep.subr.mxu0 0.0
        %639 = vmatpush1.msra.mxu0 0.0
        %640 = vmatprep.subr.mxu0 0.0
        %641 = vmatpush1.msra.mxu0 0.0
        %642 = vmatprep.subr.mxu0 0.0
        %643 = vmatpush1.msra.mxu0 0.0
        %644 = vmatprep.subr.mxu0 0.0
        %645 = vmatpush1.msra.mxu0 0.0
        %646 = vmatprep.mubr.f32.mxu0 0.0
        %647 = vmatmul.mubr.f32.gmra.mrb[0].mxu0 %v567
        %v648 = vpop.f32.mrb[0].mxu0
        %v649 = vadd.f32 %v548, %v648
        %v650 = vpop.f32.mrb[0].mxu0
        %651 = vmatprep.mubr.f32.mxu0 0.0
        %652 = vmatmul.mubr.f32.gmra.mrb[0].mxu0 %v570
        %v653 = vpop.f32.mrb[0].mxu0
        %v654 = vadd.f32 %v553, %v653
        %v655 = vpop.f32.mrb[0].mxu0
        %656 = vmatprep.mubr.f32.mxu0 0.0
        %657 = vmatmul.mubr.f32.gmra.mrb[0].mxu0 %v573
        %v658 = vpop.f32.mrb[0].mxu0
        %v659 = vadd.f32 %v558, %v658
        %v660 = vpop.f32.mrb[0].mxu0
        %661 = vmatprep.mubr.f32.mxu0 0.0
        %662 = vmatmul.mubr.f32.gmra.mrb[0].mxu0 %v576
        %v663 = vpop.f32.mrb[0].mxu0
        %v664 = vadd.f32 %v563, %v663
        %v665 = vpop.f32.mrb[0].mxu0
        %666 = vdwg.mxu0
        %v667 = vld [vmem:[%s2] sm:$0xff]
        %v668 = vld [vmem:[%s2 + $0x8] sm:$0xff]
        %v669 = vld [vmem:[%s2 + $0x10] sm:$0xff]
        %v670 = vld [vmem:[%s2 + $0x18] sm:$0xff]
        %v672 = vsel %vm565, %v667, 0
        %v675 = vsel %vm565, %v668, 0
        %v678 = vsel %vm565, %v669, 0
        %v681 = vsel %vm565, %v670, 0
        %v684 = vsel %vm578, %v433, 0
        %686 = vmatprep.subr.mxu0 0.0
        %687 = vmatpush1.msra.mxu0 %v684
        %688 = vmatprep.subr.mxu0 0.0
        %689 = vmatpush1.msra.mxu0 0.0
        %690 = vmatprep.subr.mxu0 0.0
        %691 = vmatpush1.msra.mxu0 0.0
        %692 = vmatprep.subr.mxu0 0.0
        %693 = vmatpush1.msra.mxu0 0.0
        %694 = vmatprep.subr.mxu0 0.0
        %695 = vmatpush1.msra.mxu0 0.0
        %696 = vmatprep.subr.mxu0 0.0
        %697 = vmatpush1.msra.mxu0 0.0
        %698 = vmatprep.subr.mxu0 0.0
        %699 = vmatpush1.msra.mxu0 0.0
        %700 = vmatprep.subr.mxu0 0.0
        %701 = vmatpush1.msra.mxu0 0.0
        %702 = vmatprep.subr.mxu0 0.0
        %703 = vmatpush1.msra.mxu0 0.0
        %704 = vmatprep.subr.mxu0 0.0
        %705 = vmatpush1.msra.mxu0 0.0
        %706 = vmatprep.subr.mxu0 0.0
        %707 = vmatpush1.msra.mxu0 0.0
        %708 = vmatprep.subr.mxu0 0.0
        %709 = vmatpush1.msra.mxu0 0.0
        %710 = vmatprep.subr.mxu0 0.0
        %711 = vmatpush1.msra.mxu0 0.0
        %712 = vmatprep.subr.mxu0 0.0
        %713 = vmatpush1.msra.mxu0 0.0
        %714 = vmatprep.subr.mxu0 0.0
        %715 = vmatpush1.msra.mxu0 0.0
        %716 = vmatprep.subr.mxu0 0.0
        %717 = vmatpush1.msra.mxu0 0.0
        %718 = vmatprep.subr.mxu0 0.0
        %719 = vmatpush1.msra.mxu0 0.0
        %720 = vmatprep.subr.mxu0 0.0
        %721 = vmatpush1.msra.mxu0 0.0
        %722 = vmatprep.subr.mxu0 0.0
        %723 = vmatpush1.msra.mxu0 0.0
        %724 = vmatprep.subr.mxu0 0.0
        %725 = vmatpush1.msra.mxu0 0.0
        %726 = vmatprep.subr.mxu0 0.0
        %727 = vmatpush1.msra.mxu0 0.0
        %728 = vmatprep.subr.mxu0 0.0
        %729 = vmatpush1.msra.mxu0 0.0
        %730 = vmatprep.subr.mxu0 0.0
        %731 = vmatpush1.msra.mxu0 0.0
        %732 = vmatprep.subr.mxu0 0.0
        %733 = vmatpush1.msra.mxu0 0.0
        %734 = vmatprep.subr.mxu0 0.0
        %735 = vmatpush1.msra.mxu0 0.0
        %736 = vmatprep.subr.mxu0 0.0
        %737 = vmatpush1.msra.mxu0 0.0
        %738 = vmatprep.subr.mxu0 0.0
        %739 = vmatpush1.msra.mxu0 0.0
        %740 = vmatprep.subr.mxu0 0.0
        %741 = vmatpush1.msra.mxu0 0.0
        %742 = vmatprep.subr.mxu0 0.0
        %743 = vmatpush1.msra.mxu0 0.0
        %744 = vmatprep.subr.mxu0 0.0
        %745 = vmatpush1.msra.mxu0 0.0
        %746 = vmatprep.subr.mxu0 0.0
        %747 = vmatpush1.msra.mxu0 0.0
        %748 = vmatprep.subr.mxu0 0.0
        %749 = vmatpush1.msra.mxu0 0.0
        %750 = vmatprep.mubr.f32.mxu0 0.0
        %751 = vmatmul.mubr.f32.gmra.mrb[0].mxu0 %v672
        %v752 = vpop.f32.mrb[0].mxu0
        %v753 = vadd.f32 0.0, %v752
        %v754 = vpop.f32.mrb[0].mxu0
        %755 = vmatprep.mubr.f32.mxu0 0.0
        %756 = vmatmul.mubr.f32.gmra.mrb[0].mxu0 %v675
        %v757 = vpop.f32.mrb[0].mxu0
        %v758 = vadd.f32 0.0, %v757
        %v759 = vpop.f32.mrb[0].mxu0
        %760 = vmatprep.mubr.f32.mxu0 0.0
        %761 = vmatmul.mubr.f32.gmra.mrb[0].mxu0 %v678
        %v762 = vpop.f32.mrb[0].mxu0
        %v763 = vadd.f32 0.0, %v762
        %v764 = vpop.f32.mrb[0].mxu0
        %765 = vmatprep.mubr.f32.mxu0 0.0
        %766 = vmatmul.mubr.f32.gmra.mrb[0].mxu0 %v681
        %v767 = vpop.f32.mrb[0].mxu0
        %v768 = vadd.f32 0.0, %v767
        %v769 = vpop.f32.mrb[0].mxu0
        %770 = vdwg.mxu0
        %v771 = vadd.f32 %v649, %v753
        %v772 = vadd.f32 %v654, %v758
        %v773 = vadd.f32 %v659, %v763
        %v774 = vadd.f32 %v664, %v768
        %v775 = vld [vmem:[%s3] sm:$0xff]
        %v776 = vld [vmem:[%s3 + $0x8] sm:$0xff]
        %v777 = vld [vmem:[%s3 + $0x10] sm:$0xff]
        %v778 = vld [vmem:[%s3 + $0x18] sm:$0xff]
        %v780 = vsel %vm565, %v775, 0
        %v783 = vsel %vm565, %v776, 0
        %v786 = vsel %vm565, %v777, 0
        %v789 = vsel %vm565, %v778, 0
        %v792 = vsel %vm578, %v536, 0
        %794 = vmatprep.subr.mxu0 0.0
        %795 = vmatpush1.msra.mxu0 %v792
        %796 = vmatprep.subr.mxu0 0.0
        %797 = vmatpush1.msra.mxu0 0.0
        %798 = vmatprep.subr.mxu0 0.0
        %799 = vmatpush1.msra.mxu0 0.0
        %800 = vmatprep.subr.mxu0 0.0
        %801 = vmatpush1.msra.mxu0 0.0
        %802 = vmatprep.subr.mxu0 0.0
        %803 = vmatpush1.msra.mxu0 0.0
        %804 = vmatprep.subr.mxu0 0.0
        %805 = vmatpush1.msra.mxu0 0.0
        %806 = vmatprep.subr.mxu0 0.0
        %807 = vmatpush1.msra.mxu0 0.0
        %808 = vmatprep.subr.mxu0 0.0
        %809 = vmatpush1.msra.mxu0 0.0
        %810 = vmatprep.subr.mxu0 0.0
        %811 = vmatpush1.msra.mxu0 0.0
        %812 = vmatprep.subr.mxu0 0.0
        %813 = vmatpush1.msra.mxu0 0.0
        %814 = vmatprep.subr.mxu0 0.0
        %815 = vmatpush1.msra.mxu0 0.0
        %816 = vmatprep.subr.mxu0 0.0
        %817 = vmatpush1.msra.mxu0 0.0
        %818 = vmatprep.subr.mxu0 0.0
        %819 = vmatpush1.msra.mxu0 0.0
        %820 = vmatprep.subr.mxu0 0.0
        %821 = vmatpush1.msra.mxu0 0.0
        %822 = vmatprep.subr.mxu0 0.0
        %823 = vmatpush1.msra.mxu0 0.0
        %824 = vmatprep.subr.mxu0 0.0
        %825 = vmatpush1.msra.mxu0 0.0
        %826 = vmatprep.subr.mxu0 0.0
        %827 = vmatpush1.msra.mxu0 0.0
        %828 = vmatprep.subr.mxu0 0.0
        %829 = vmatpush1.msra.mxu0 0.0
        %830 = vmatprep.subr.mxu0 0.0
        %831 = vmatpush1.msra.mxu0 0.0
        %832 = vmatprep.subr.mxu0 0.0
        %833 = vmatpush1.msra.mxu0 0.0
        %834 = vmatprep.subr.mxu0 0.0
        %835 = vmatpush1.msra.mxu0 0.0
        %836 = vmatprep.subr.mxu0 0.0
        %837 = vmatpush1.msra.mxu0 0.0
        %838 = vmatprep.subr.mxu0 0.0
        %839 = vmatpush1.msra.mxu0 0.0
        %840 = vmatprep.subr.mxu0 0.0
        %841 = vmatpush1.msra.mxu0 0.0
        %842 = vmatprep.subr.mxu0 0.0
        %843 = vmatpush1.msra.mxu0 0.0
        %844 = vmatprep.subr.mxu0 0.0
        %845 = vmatpush1.msra.mxu0 0.0
        %846 = vmatprep.subr.mxu0 0.0
        %847 = vmatpush1.msra.mxu0 0.0
        %848 = vmatprep.subr.mxu0 0.0
        %849 = vmatpush1.msra.mxu0 0.0
        %850 = vmatprep.subr.mxu0 0.0
        %851 = vmatpush1.msra.mxu0 0.0
        %852 = vmatprep.subr.mxu0 0.0
        %853 = vmatpush1.msra.mxu0 0.0
        %854 = vmatprep.subr.mxu0 0.0
        %855 = vmatpush1.msra.mxu0 0.0
        %856 = vmatprep.subr.mxu0 0.0
        %857 = vmatpush1.msra.mxu0 0.0
        %858 = vmatprep.mubr.f32.mxu0 0.0
        %859 = vmatmul.mubr.f32.gmra.mrb[0].mxu0 %v780
        %v860 = vpop.f32.mrb[0].mxu0
        %v861 = vadd.f32 0.0, %v860
        %v862 = vpop.f32.mrb[0].mxu0
        %863 = vmatprep.mubr.f32.mxu0 0.0
        %864 = vmatmul.mubr.f32.gmra.mrb[0].mxu0 %v783
        %v865 = vpop.f32.mrb[0].mxu0
        %v866 = vadd.f32 0.0, %v865
        %v867 = vpop.f32.mrb[0].mxu0
        %868 = vmatprep.mubr.f32.mxu0 0.0
        %869 = vmatmul.mubr.f32.gmra.mrb[0].mxu0 %v786
        %v870 = vpop.f32.mrb[0].mxu0
        %v871 = vadd.f32 0.0, %v870
        %v872 = vpop.f32.mrb[0].mxu0
        %873 = vmatprep.mubr.f32.mxu0 0.0
        %874 = vmatmul.mubr.f32.gmra.mrb[0].mxu0 %v789
        %v875 = vpop.f32.mrb[0].mxu0
        %v876 = vadd.f32 0.0, %v875
        %v877 = vpop.f32.mrb[0].mxu0
        %878 = vdwg.mxu0
        %v879 = vadd.f32 %v771, %v861
        %v880 = vadd.f32 %v772, %v866
        %v881 = vadd.f32 %v773, %v871
        %v882 = vadd.f32 %v774, %v876
        %v883 = vmul.f32 %v433, 2.0
        %v884 = vmul.f32 %v883, %v536
        %v885 = vmul.f32 %v536, %v536
        %v886 = vmul.f32 %v885, 2.0
        %v887 = vsub.f32 %v886, 1.0
        %s888 = scalar_lea.vmem %s2, 32
        %v889 = vld [vmem:[%s888] sm:$0xff]
        %v890 = vld [vmem:[%s888 + $0x8] sm:$0xff]
        %v891 = vld [vmem:[%s888 + $0x10] sm:$0xff]
        %v892 = vld [vmem:[%s888 + $0x18] sm:$0xff]
        %v894 = vsel %vm565, %v889, 0
        %v897 = vsel %vm565, %v890, 0
        %v900 = vsel %vm565, %v891, 0
        %v903 = vsel %vm565, %v892, 0
        %v906 = vsel %vm578, %v884, 0
        %908 = vmatprep.subr.mxu0 0.0
        %909 = vmatpush1.msra.mxu0 %v906
        %910 = vmatprep.subr.mxu0 0.0
        %911 = vmatpush1.msra.mxu0 0.0
        %912 = vmatprep.subr.mxu0 0.0
        %913 = vmatpush1.msra.mxu0 0.0
        %914 = vmatprep.subr.mxu0 0.0
        %915 = vmatpush1.msra.mxu0 0.0
        %916 = vmatprep.subr.mxu0 0.0
        %917 = vmatpush1.msra.mxu0 0.0
        %918 = vmatprep.subr.mxu0 0.0
        %919 = vmatpush1.msra.mxu0 0.0
        %920 = vmatprep.subr.mxu0 0.0
        %921 = vmatpush1.msra.mxu0 0.0
        %922 = vmatprep.subr.mxu0 0.0
        %923 = vmatpush1.msra.mxu0 0.0
        %924 = vmatprep.subr.mxu0 0.0
        %925 = vmatpush1.msra.mxu0 0.0
        %926 = vmatprep.subr.mxu0 0.0
        %927 = vmatpush1.msra.mxu0 0.0
        %928 = vmatprep.subr.mxu0 0.0
        %929 = vmatpush1.msra.mxu0 0.0
        %930 = vmatprep.subr.mxu0 0.0
        %931 = vmatpush1.msra.mxu0 0.0
        %932 = vmatprep.subr.mxu0 0.0
        %933 = vmatpush1.msra.mxu0 0.0
        %934 = vmatprep.subr.mxu0 0.0
        %935 = vmatpush1.msra.mxu0 0.0
        %936 = vmatprep.subr.mxu0 0.0
        %937 = vmatpush1.msra.mxu0 0.0
        %938 = vmatprep.subr.mxu0 0.0
        %939 = vmatpush1.msra.mxu0 0.0
        %940 = vmatprep.subr.mxu0 0.0
        %941 = vmatpush1.msra.mxu0 0.0
        %942 = vmatprep.subr.mxu0 0.0
        %943 = vmatpush1.msra.mxu0 0.0
        %944 = vmatprep.subr.mxu0 0.0
        %945 = vmatpush1.msra.mxu0 0.0
        %946 = vmatprep.subr.mxu0 0.0
        %947 = vmatpush1.msra.mxu0 0.0
        %948 = vmatprep.subr.mxu0 0.0
        %949 = vmatpush1.msra.mxu0 0.0
        %950 = vmatprep.subr.mxu0 0.0
        %951 = vmatpush1.msra.mxu0 0.0
        %952 = vmatprep.subr.mxu0 0.0
        %953 = vmatpush1.msra.mxu0 0.0
        %954 = vmatprep.subr.mxu0 0.0
        %955 = vmatpush1.msra.mxu0 0.0
        %956 = vmatprep.subr.mxu0 0.0
        %957 = vmatpush1.msra.mxu0 0.0
        %958 = vmatprep.subr.mxu0 0.0
        %959 = vmatpush1.msra.mxu0 0.0
        %960 = vmatprep.subr.mxu0 0.0
        %961 = vmatpush1.msra.mxu0 0.0
        %962 = vmatprep.subr.mxu0 0.0
        %963 = vmatpush1.msra.mxu0 0.0
        %964 = vmatprep.subr.mxu0 0.0
        %965 = vmatpush1.msra.mxu0 0.0
        %966 = vmatprep.subr.mxu0 0.0
        %967 = vmatpush1.msra.mxu0 0.0
        %968 = vmatprep.subr.mxu0 0.0
        %969 = vmatpush1.msra.mxu0 0.0
        %970 = vmatprep.subr.mxu0 0.0
        %971 = vmatpush1.msra.mxu0 0.0
        %972 = vmatprep.mubr.f32.mxu0 0.0
        %973 = vmatmul.mubr.f32.gmra.mrb[0].mxu0 %v894
        %v974 = vpop.f32.mrb[0].mxu0
        %v975 = vadd.f32 0.0, %v974
        %v976 = vpop.f32.mrb[0].mxu0
        %977 = vmatprep.mubr.f32.mxu0 0.0
        %978 = vmatmul.mubr.f32.gmra.mrb[0].mxu0 %v897
        %v979 = vpop.f32.mrb[0].mxu0
        %v980 = vadd.f32 0.0, %v979
        %v981 = vpop.f32.mrb[0].mxu0
        %982 = vmatprep.mubr.f32.mxu0 0.0
        %983 = vmatmul.mubr.f32.gmra.mrb[0].mxu0 %v900
        %v984 = vpop.f32.mrb[0].mxu0
        %v985 = vadd.f32 0.0, %v984
        %v986 = vpop.f32.mrb[0].mxu0
        %987 = vmatprep.mubr.f32.mxu0 0.0
        %988 = vmatmul.mubr.f32.gmra.mrb[0].mxu0 %v903
        %v989 = vpop.f32.mrb[0].mxu0
        %v990 = vadd.f32 0.0, %v989
        %v991 = vpop.f32.mrb[0].mxu0
        %992 = vdwg.mxu0
        %v993 = vadd.f32 %v879, %v975
        %v994 = vadd.f32 %v880, %v980
        %v995 = vadd.f32 %v881, %v985
        %v996 = vadd.f32 %v882, %v990
        %s997 = scalar_lea.vmem %s3, 32
        %v998 = vld [vmem:[%s997] sm:$0xff]
        %v999 = vld [vmem:[%s997 + $0x8] sm:$0xff]
        %v1000 = vld [vmem:[%s997 + $0x10] sm:$0xff]
        %v1001 = vld [vmem:[%s997 + $0x18] sm:$0xff]
        %v1003 = vsel %vm565, %v998, 0
        %v1006 = vsel %vm565, %v999, 0
        %v1009 = vsel %vm565, %v1000, 0
        %v1012 = vsel %vm565, %v1001, 0
        %v1015 = vsel %vm578, %v887, 0
        %1017 = vmatprep.subr.mxu0 0.0
        %1018 = vmatpush1.msra.mxu0 %v1015
        %1019 = vmatprep.subr.mxu0 0.0
        %1020 = vmatpush1.msra.mxu0 0.0
        %1021 = vmatprep.subr.mxu0 0.0
        %1022 = vmatpush1.msra.mxu0 0.0
        %1023 = vmatprep.subr.mxu0 0.0
        %1024 = vmatpush1.msra.mxu0 0.0
        %1025 = vmatprep.subr.mxu0 0.0
        %1026 = vmatpush1.msra.mxu0 0.0
        %1027 = vmatprep.subr.mxu0 0.0
        %1028 = vmatpush1.msra.mxu0 0.0
        %1029 = vmatprep.subr.mxu0 0.0
        %1030 = vmatpush1.msra.mxu0 0.0
        %1031 = vmatprep.subr.mxu0 0.0
        %1032 = vmatpush1.msra.mxu0 0.0
        %1033 = vmatprep.subr.mxu0 0.0
        %1034 = vmatpush1.msra.mxu0 0.0
        %1035 = vmatprep.subr.mxu0 0.0
        %1036 = vmatpush1.msra.mxu0 0.0
        %1037 = vmatprep.subr.mxu0 0.0
        %1038 = vmatpush1.msra.mxu0 0.0
        %1039 = vmatprep.subr.mxu0 0.0
        %1040 = vmatpush1.msra.mxu0 0.0
        %1041 = vmatprep.subr.mxu0 0.0
        %1042 = vmatpush1.msra.mxu0 0.0
        %1043 = vmatprep.subr.mxu0 0.0
        %1044 = vmatpush1.msra.mxu0 0.0
        %1045 = vmatprep.subr.mxu0 0.0
        %1046 = vmatpush1.msra.mxu0 0.0
        %1047 = vmatprep.subr.mxu0 0.0
        %1048 = vmatpush1.msra.mxu0 0.0
        %1049 = vmatprep.subr.mxu0 0.0
        %1050 = vmatpush1.msra.mxu0 0.0
        %1051 = vmatprep.subr.mxu0 0.0
        %1052 = vmatpush1.msra.mxu0 0.0
        %1053 = vmatprep.subr.mxu0 0.0
        %1054 = vmatpush1.msra.mxu0 0.0
        %1055 = vmatprep.subr.mxu0 0.0
        %1056 = vmatpush1.msra.mxu0 0.0
        %1057 = vmatprep.subr.mxu0 0.0
        %1058 = vmatpush1.msra.mxu0 0.0
        %1059 = vmatprep.subr.mxu0 0.0
        %1060 = vmatpush1.msra.mxu0 0.0
        %1061 = vmatprep.subr.mxu0 0.0
        %1062 = vmatpush1.msra.mxu0 0.0
        %1063 = vmatprep.subr.mxu0 0.0
        %1064 = vmatpush1.msra.mxu0 0.0
        %1065 = vmatprep.subr.mxu0 0.0
        %1066 = vmatpush1.msra.mxu0 0.0
        %1067 = vmatprep.subr.mxu0 0.0
        %1068 = vmatpush1.msra.mxu0 0.0
        %1069 = vmatprep.subr.mxu0 0.0
        %1070 = vmatpush1.msra.mxu0 0.0
        %1071 = vmatprep.subr.mxu0 0.0
        %1072 = vmatpush1.msra.mxu0 0.0
        %1073 = vmatprep.subr.mxu0 0.0
        %1074 = vmatpush1.msra.mxu0 0.0
        %1075 = vmatprep.subr.mxu0 0.0
        %1076 = vmatpush1.msra.mxu0 0.0
        %1077 = vmatprep.subr.mxu0 0.0
        %1078 = vmatpush1.msra.mxu0 0.0
        %1079 = vmatprep.subr.mxu0 0.0
        %1080 = vmatpush1.msra.mxu0 0.0
        %1081 = vmatprep.mubr.f32.mxu0 0.0
        %1082 = vmatmul.mubr.f32.gmra.mrb[0].mxu0 %v1003
        %v1083 = vpop.f32.mrb[0].mxu0
        %v1084 = vadd.f32 0.0, %v1083
        %v1085 = vpop.f32.mrb[0].mxu0
        %1086 = vmatprep.mubr.f32.mxu0 0.0
        %1087 = vmatmul.mubr.f32.gmra.mrb[0].mxu0 %v1006
        %v1088 = vpop.f32.mrb[0].mxu0
        %v1089 = vadd.f32 0.0, %v1088
        %v1090 = vpop.f32.mrb[0].mxu0
        %1091 = vmatprep.mubr.f32.mxu0 0.0
        %1092 = vmatmul.mubr.f32.gmra.mrb[0].mxu0 %v1009
        %v1093 = vpop.f32.mrb[0].mxu0
        %v1094 = vadd.f32 0.0, %v1093
        %v1095 = vpop.f32.mrb[0].mxu0
        %1096 = vmatprep.mubr.f32.mxu0 0.0
        %1097 = vmatmul.mubr.f32.gmra.mrb[0].mxu0 %v1012
        %v1098 = vpop.f32.mrb[0].mxu0
        %v1099 = vadd.f32 0.0, %v1098
        %v1100 = vpop.f32.mrb[0].mxu0
        %1101 = vdwg.mxu0
        %v1102 = vadd.f32 %v993, %v1084
        %v1103 = vadd.f32 %v994, %v1089
        %v1104 = vadd.f32 %v995, %v1094
        %v1105 = vadd.f32 %v996, %v1099
        %v1106 = vmul.f32 %v884, 2.0
        %v1107 = vmul.f32 %v1106, %v887
        %v1108 = vmul.f32 %v887, %v887
        %v1109 = vmul.f32 %v1108, 2.0
        %v1110 = vsub.f32 %v1109, 1.0
        %s1111 = scalar_lea.vmem %s2, 64
        %v1112 = vld [vmem:[%s1111] sm:$0xff]
        %v1113 = vld [vmem:[%s1111 + $0x8] sm:$0xff]
        %v1114 = vld [vmem:[%s1111 + $0x10] sm:$0xff]
        %v1115 = vld [vmem:[%s1111 + $0x18] sm:$0xff]
        %v1117 = vsel %vm565, %v1112, 0
        %v1120 = vsel %vm565, %v1113, 0
        %v1123 = vsel %vm565, %v1114, 0
        %v1126 = vsel %vm565, %v1115, 0
        %v1129 = vsel %vm578, %v1107, 0
        %1131 = vmatprep.subr.mxu0 0.0
        %1132 = vmatpush1.msra.mxu0 %v1129
        %1133 = vmatprep.subr.mxu0 0.0
        %1134 = vmatpush1.msra.mxu0 0.0
        %1135 = vmatprep.subr.mxu0 0.0
        %1136 = vmatpush1.msra.mxu0 0.0
        %1137 = vmatprep.subr.mxu0 0.0
        %1138 = vmatpush1.msra.mxu0 0.0
        %1139 = vmatprep.subr.mxu0 0.0
        %1140 = vmatpush1.msra.mxu0 0.0
        %1141 = vmatprep.subr.mxu0 0.0
        %1142 = vmatpush1.msra.mxu0 0.0
        %1143 = vmatprep.subr.mxu0 0.0
        %1144 = vmatpush1.msra.mxu0 0.0
        %1145 = vmatprep.subr.mxu0 0.0
        %1146 = vmatpush1.msra.mxu0 0.0
        %1147 = vmatprep.subr.mxu0 0.0
        %1148 = vmatpush1.msra.mxu0 0.0
        %1149 = vmatprep.subr.mxu0 0.0
        %1150 = vmatpush1.msra.mxu0 0.0
        %1151 = vmatprep.subr.mxu0 0.0
        %1152 = vmatpush1.msra.mxu0 0.0
        %1153 = vmatprep.subr.mxu0 0.0
        %1154 = vmatpush1.msra.mxu0 0.0
        %1155 = vmatprep.subr.mxu0 0.0
        %1156 = vmatpush1.msra.mxu0 0.0
        %1157 = vmatprep.subr.mxu0 0.0
        %1158 = vmatpush1.msra.mxu0 0.0
        %1159 = vmatprep.subr.mxu0 0.0
        %1160 = vmatpush1.msra.mxu0 0.0
        %1161 = vmatprep.subr.mxu0 0.0
        %1162 = vmatpush1.msra.mxu0 0.0
        %1163 = vmatprep.subr.mxu0 0.0
        %1164 = vmatpush1.msra.mxu0 0.0
        %1165 = vmatprep.subr.mxu0 0.0
        %1166 = vmatpush1.msra.mxu0 0.0
        %1167 = vmatprep.subr.mxu0 0.0
        %1168 = vmatpush1.msra.mxu0 0.0
        %1169 = vmatprep.subr.mxu0 0.0
        %1170 = vmatpush1.msra.mxu0 0.0
        %1171 = vmatprep.subr.mxu0 0.0
        %1172 = vmatpush1.msra.mxu0 0.0
        %1173 = vmatprep.subr.mxu0 0.0
        %1174 = vmatpush1.msra.mxu0 0.0
        %1175 = vmatprep.subr.mxu0 0.0
        %1176 = vmatpush1.msra.mxu0 0.0
        %1177 = vmatprep.subr.mxu0 0.0
        %1178 = vmatpush1.msra.mxu0 0.0
        %1179 = vmatprep.subr.mxu0 0.0
        %1180 = vmatpush1.msra.mxu0 0.0
        %1181 = vmatprep.subr.mxu0 0.0
        %1182 = vmatpush1.msra.mxu0 0.0
        %1183 = vmatprep.subr.mxu0 0.0
        %1184 = vmatpush1.msra.mxu0 0.0
        %1185 = vmatprep.subr.mxu0 0.0
        %1186 = vmatpush1.msra.mxu0 0.0
        %1187 = vmatprep.subr.mxu0 0.0
        %1188 = vmatpush1.msra.mxu0 0.0
        %1189 = vmatprep.subr.mxu0 0.0
        %1190 = vmatpush1.msra.mxu0 0.0
        %1191 = vmatprep.subr.mxu0 0.0
        %1192 = vmatpush1.msra.mxu0 0.0
        %1193 = vmatprep.subr.mxu0 0.0
        %1194 = vmatpush1.msra.mxu0 0.0
        %1195 = vmatprep.mubr.f32.mxu0 0.0
        %1196 = vmatmul.mubr.f32.gmra.mrb[0].mxu0 %v1117
        %v1197 = vpop.f32.mrb[0].mxu0
        %v1198 = vadd.f32 0.0, %v1197
        %v1199 = vpop.f32.mrb[0].mxu0
        %1200 = vmatprep.mubr.f32.mxu0 0.0
        %1201 = vmatmul.mubr.f32.gmra.mrb[0].mxu0 %v1120
        %v1202 = vpop.f32.mrb[0].mxu0
        %v1203 = vadd.f32 0.0, %v1202
        %v1204 = vpop.f32.mrb[0].mxu0
        %1205 = vmatprep.mubr.f32.mxu0 0.0
        %1206 = vmatmul.mubr.f32.gmra.mrb[0].mxu0 %v1123
        %v1207 = vpop.f32.mrb[0].mxu0
        %v1208 = vadd.f32 0.0, %v1207
        %v1209 = vpop.f32.mrb[0].mxu0
        %1210 = vmatprep.mubr.f32.mxu0 0.0
        %1211 = vmatmul.mubr.f32.gmra.mrb[0].mxu0 %v1126
        %v1212 = vpop.f32.mrb[0].mxu0
        %v1213 = vadd.f32 0.0, %v1212
        %v1214 = vpop.f32.mrb[0].mxu0
        %1215 = vdwg.mxu0
        %v1216 = vadd.f32 %v1102, %v1198
        %v1217 = vadd.f32 %v1103, %v1203
        %v1218 = vadd.f32 %v1104, %v1208
        %v1219 = vadd.f32 %v1105, %v1213
        %s1220 = scalar_lea.vmem %s3, 64
        %v1221 = vld [vmem:[%s1220] sm:$0xff]
        %v1222 = vld [vmem:[%s1220 + $0x8] sm:$0xff]
        %v1223 = vld [vmem:[%s1220 + $0x10] sm:$0xff]
        %v1224 = vld [vmem:[%s1220 + $0x18] sm:$0xff]
        %v1226 = vsel %vm565, %v1221, 0
        %v1229 = vsel %vm565, %v1222, 0
        %v1232 = vsel %vm565, %v1223, 0
        %v1235 = vsel %vm565, %v1224, 0
        %v1238 = vsel %vm578, %v1110, 0
        %1240 = vmatprep.subr.mxu0 0.0
        %1241 = vmatpush1.msra.mxu0 %v1238
        %1242 = vmatprep.subr.mxu0 0.0
        %1243 = vmatpush1.msra.mxu0 0.0
        %1244 = vmatprep.subr.mxu0 0.0
        %1245 = vmatpush1.msra.mxu0 0.0
        %1246 = vmatprep.subr.mxu0 0.0
        %1247 = vmatpush1.msra.mxu0 0.0
        %1248 = vmatprep.subr.mxu0 0.0
        %1249 = vmatpush1.msra.mxu0 0.0
        %1250 = vmatprep.subr.mxu0 0.0
        %1251 = vmatpush1.msra.mxu0 0.0
        %1252 = vmatprep.subr.mxu0 0.0
        %1253 = vmatpush1.msra.mxu0 0.0
        %1254 = vmatprep.subr.mxu0 0.0
        %1255 = vmatpush1.msra.mxu0 0.0
        %1256 = vmatprep.subr.mxu0 0.0
        %1257 = vmatpush1.msra.mxu0 0.0
        %1258 = vmatprep.subr.mxu0 0.0
        %1259 = vmatpush1.msra.mxu0 0.0
        %1260 = vmatprep.subr.mxu0 0.0
        %1261 = vmatpush1.msra.mxu0 0.0
        %1262 = vmatprep.subr.mxu0 0.0
        %1263 = vmatpush1.msra.mxu0 0.0
        %1264 = vmatprep.subr.mxu0 0.0
        %1265 = vmatpush1.msra.mxu0 0.0
        %1266 = vmatprep.subr.mxu0 0.0
        %1267 = vmatpush1.msra.mxu0 0.0
        %1268 = vmatprep.subr.mxu0 0.0
        %1269 = vmatpush1.msra.mxu0 0.0
        %1270 = vmatprep.subr.mxu0 0.0
        %1271 = vmatpush1.msra.mxu0 0.0
        %1272 = vmatprep.subr.mxu0 0.0
        %1273 = vmatpush1.msra.mxu0 0.0
        %1274 = vmatprep.subr.mxu0 0.0
        %1275 = vmatpush1.msra.mxu0 0.0
        %1276 = vmatprep.subr.mxu0 0.0
        %1277 = vmatpush1.msra.mxu0 0.0
        %1278 = vmatprep.subr.mxu0 0.0
        %1279 = vmatpush1.msra.mxu0 0.0
        %1280 = vmatprep.subr.mxu0 0.0
        %1281 = vmatpush1.msra.mxu0 0.0
        %1282 = vmatprep.subr.mxu0 0.0
        %1283 = vmatpush1.msra.mxu0 0.0
        %1284 = vmatprep.subr.mxu0 0.0
        %1285 = vmatpush1.msra.mxu0 0.0
        %1286 = vmatprep.subr.mxu0 0.0
        %1287 = vmatpush1.msra.mxu0 0.0
        %1288 = vmatprep.subr.mxu0 0.0
        %1289 = vmatpush1.msra.mxu0 0.0
        %1290 = vmatprep.subr.mxu0 0.0
        %1291 = vmatpush1.msra.mxu0 0.0
        %1292 = vmatprep.subr.mxu0 0.0
        %1293 = vmatpush1.msra.mxu0 0.0
        %1294 = vmatprep.subr.mxu0 0.0
        %1295 = vmatpush1.msra.mxu0 0.0
        %1296 = vmatprep.subr.mxu0 0.0
        %1297 = vmatpush1.msra.mxu0 0.0
        %1298 = vmatprep.subr.mxu0 0.0
        %1299 = vmatpush1.msra.mxu0 0.0
        %1300 = vmatprep.subr.mxu0 0.0
        %1301 = vmatpush1.msra.mxu0 0.0
        %1302 = vmatprep.subr.mxu0 0.0
        %1303 = vmatpush1.msra.mxu0 0.0
        %1304 = vmatprep.mubr.f32.mxu0 0.0
        %1305 = vmatmul.mubr.f32.gmra.mrb[0].mxu0 %v1226
        %v1306 = vpop.f32.mrb[0].mxu0
        %v1307 = vadd.f32 0.0, %v1306
        %v1308 = vpop.f32.mrb[0].mxu0
        %1309 = vmatprep.mubr.f32.mxu0 0.0
        %1310 = vmatmul.mubr.f32.gmra.mrb[0].mxu0 %v1229
        %v1311 = vpop.f32.mrb[0].mxu0
        %v1312 = vadd.f32 0.0, %v1311
        %v1313 = vpop.f32.mrb[0].mxu0
        %1314 = vmatprep.mubr.f32.mxu0 0.0
        %1315 = vmatmul.mubr.f32.gmra.mrb[0].mxu0 %v1232
        %v1316 = vpop.f32.mrb[0].mxu0
        %v1317 = vadd.f32 0.0, %v1316
        %v1318 = vpop.f32.mrb[0].mxu0
        %1319 = vmatprep.mubr.f32.mxu0 0.0
        %1320 = vmatmul.mubr.f32.gmra.mrb[0].mxu0 %v1235
        %v1321 = vpop.f32.mrb[0].mxu0
        %v1322 = vadd.f32 0.0, %v1321
        %v1323 = vpop.f32.mrb[0].mxu0
        %1324 = vdwg.mxu0
        %v1325 = vadd.f32 %v1216, %v1307
        %v1326 = vadd.f32 %v1217, %v1312
        %v1327 = vadd.f32 %v1218, %v1317
        %v1328 = vadd.f32 %v1219, %v1322
        %v1329 = vmul.f32 %v1107, 2.0
        %v1330 = vmul.f32 %v1329, %v1110
        %v1331 = vmul.f32 %v1110, %v1110
        %v1332 = vmul.f32 %v1331, 2.0
        %v1333 = vsub.f32 %v1332, 1.0
        %s1334 = scalar_lea.vmem %s2, 96
        %v1335 = vld [vmem:[%s1334] sm:$0xff]
        %v1336 = vld [vmem:[%s1334 + $0x8] sm:$0xff]
        %v1337 = vld [vmem:[%s1334 + $0x10] sm:$0xff]
        %v1338 = vld [vmem:[%s1334 + $0x18] sm:$0xff]
        %v1340 = vsel %vm565, %v1335, 0
        %v1343 = vsel %vm565, %v1336, 0
        %v1346 = vsel %vm565, %v1337, 0
        %v1349 = vsel %vm565, %v1338, 0
        %v1352 = vsel %vm578, %v1330, 0
        %1354 = vmatprep.subr.mxu0 0.0
        %1355 = vmatpush1.msra.mxu0 %v1352
        %1356 = vmatprep.subr.mxu0 0.0
        %1357 = vmatpush1.msra.mxu0 0.0
        %1358 = vmatprep.subr.mxu0 0.0
        %1359 = vmatpush1.msra.mxu0 0.0
        %1360 = vmatprep.subr.mxu0 0.0
        %1361 = vmatpush1.msra.mxu0 0.0
        %1362 = vmatprep.subr.mxu0 0.0
        %1363 = vmatpush1.msra.mxu0 0.0
        %1364 = vmatprep.subr.mxu0 0.0
        %1365 = vmatpush1.msra.mxu0 0.0
        %1366 = vmatprep.subr.mxu0 0.0
        %1367 = vmatpush1.msra.mxu0 0.0
        %1368 = vmatprep.subr.mxu0 0.0
        %1369 = vmatpush1.msra.mxu0 0.0
        %1370 = vmatprep.subr.mxu0 0.0
        %1371 = vmatpush1.msra.mxu0 0.0
        %1372 = vmatprep.subr.mxu0 0.0
        %1373 = vmatpush1.msra.mxu0 0.0
        %1374 = vmatprep.subr.mxu0 0.0
        %1375 = vmatpush1.msra.mxu0 0.0
        %1376 = vmatprep.subr.mxu0 0.0
        %1377 = vmatpush1.msra.mxu0 0.0
        %1378 = vmatprep.subr.mxu0 0.0
        %1379 = vmatpush1.msra.mxu0 0.0
        %1380 = vmatprep.subr.mxu0 0.0
        %1381 = vmatpush1.msra.mxu0 0.0
        %1382 = vmatprep.subr.mxu0 0.0
        %1383 = vmatpush1.msra.mxu0 0.0
        %1384 = vmatprep.subr.mxu0 0.0
        %1385 = vmatpush1.msra.mxu0 0.0
        %1386 = vmatprep.subr.mxu0 0.0
        %1387 = vmatpush1.msra.mxu0 0.0
        %1388 = vmatprep.subr.mxu0 0.0
        %1389 = vmatpush1.msra.mxu0 0.0
        %1390 = vmatprep.subr.mxu0 0.0
        %1391 = vmatpush1.msra.mxu0 0.0
        %1392 = vmatprep.subr.mxu0 0.0
        %1393 = vmatpush1.msra.mxu0 0.0
        %1394 = vmatprep.subr.mxu0 0.0
        %1395 = vmatpush1.msra.mxu0 0.0
        %1396 = vmatprep.subr.mxu0 0.0
        %1397 = vmatpush1.msra.mxu0 0.0
        %1398 = vmatprep.subr.mxu0 0.0
        %1399 = vmatpush1.msra.mxu0 0.0
        %1400 = vmatprep.subr.mxu0 0.0
        %1401 = vmatpush1.msra.mxu0 0.0
        %1402 = vmatprep.subr.mxu0 0.0
        %1403 = vmatpush1.msra.mxu0 0.0
        %1404 = vmatprep.subr.mxu0 0.0
        %1405 = vmatpush1.msra.mxu0 0.0
        %1406 = vmatprep.subr.mxu0 0.0
        %1407 = vmatpush1.msra.mxu0 0.0
        %1408 = vmatprep.subr.mxu0 0.0
        %1409 = vmatpush1.msra.mxu0 0.0
        %1410 = vmatprep.subr.mxu0 0.0
        %1411 = vmatpush1.msra.mxu0 0.0
        %1412 = vmatprep.subr.mxu0 0.0
        %1413 = vmatpush1.msra.mxu0 0.0
        %1414 = vmatprep.subr.mxu0 0.0
        %1415 = vmatpush1.msra.mxu0 0.0
        %1416 = vmatprep.subr.mxu0 0.0
        %1417 = vmatpush1.msra.mxu0 0.0
        %1418 = vmatprep.mubr.f32.mxu0 0.0
        %1419 = vmatmul.mubr.f32.gmra.mrb[0].mxu0 %v1340
        %v1420 = vpop.f32.mrb[0].mxu0
        %v1421 = vadd.f32 0.0, %v1420
        %v1422 = vpop.f32.mrb[0].mxu0
        %1423 = vmatprep.mubr.f32.mxu0 0.0
        %1424 = vmatmul.mubr.f32.gmra.mrb[0].mxu0 %v1343
        %v1425 = vpop.f32.mrb[0].mxu0
        %v1426 = vadd.f32 0.0, %v1425
        %v1427 = vpop.f32.mrb[0].mxu0
        %1428 = vmatprep.mubr.f32.mxu0 0.0
        %1429 = vmatmul.mubr.f32.gmra.mrb[0].mxu0 %v1346
        %v1430 = vpop.f32.mrb[0].mxu0
        %v1431 = vadd.f32 0.0, %v1430
        %v1432 = vpop.f32.mrb[0].mxu0
        %1433 = vmatprep.mubr.f32.mxu0 0.0
        %1434 = vmatmul.mubr.f32.gmra.mrb[0].mxu0 %v1349
        %v1435 = vpop.f32.mrb[0].mxu0
        %v1436 = vadd.f32 0.0, %v1435
        %v1437 = vpop.f32.mrb[0].mxu0
        %1438 = vdwg.mxu0
        %v1439 = vadd.f32 %v1325, %v1421
        %v1440 = vadd.f32 %v1326, %v1426
        %v1441 = vadd.f32 %v1327, %v1431
        %v1442 = vadd.f32 %v1328, %v1436
        %s1443 = scalar_lea.vmem %s3, 96
        %v1444 = vld [vmem:[%s1443] sm:$0xff]
        %v1445 = vld [vmem:[%s1443 + $0x8] sm:$0xff]
        %v1446 = vld [vmem:[%s1443 + $0x10] sm:$0xff]
        %v1447 = vld [vmem:[%s1443 + $0x18] sm:$0xff]
        %v1449 = vsel %vm565, %v1444, 0
        %v1452 = vsel %vm565, %v1445, 0
        %v1455 = vsel %vm565, %v1446, 0
        %v1458 = vsel %vm565, %v1447, 0
        %v1461 = vsel %vm578, %v1333, 0
        %1463 = vmatprep.subr.mxu0 0.0
        %1464 = vmatpush1.msra.mxu0 %v1461
        %1465 = vmatprep.subr.mxu0 0.0
        %1466 = vmatpush1.msra.mxu0 0.0
        %1467 = vmatprep.subr.mxu0 0.0
        %1468 = vmatpush1.msra.mxu0 0.0
        %1469 = vmatprep.subr.mxu0 0.0
        %1470 = vmatpush1.msra.mxu0 0.0
        %1471 = vmatprep.subr.mxu0 0.0
        %1472 = vmatpush1.msra.mxu0 0.0
        %1473 = vmatprep.subr.mxu0 0.0
        %1474 = vmatpush1.msra.mxu0 0.0
        %1475 = vmatprep.subr.mxu0 0.0
        %1476 = vmatpush1.msra.mxu0 0.0
        %1477 = vmatprep.subr.mxu0 0.0
        %1478 = vmatpush1.msra.mxu0 0.0
        %1479 = vmatprep.subr.mxu0 0.0
        %1480 = vmatpush1.msra.mxu0 0.0
        %1481 = vmatprep.subr.mxu0 0.0
        %1482 = vmatpush1.msra.mxu0 0.0
        %1483 = vmatprep.subr.mxu0 0.0
        %1484 = vmatpush1.msra.mxu0 0.0
        %1485 = vmatprep.subr.mxu0 0.0
        %1486 = vmatpush1.msra.mxu0 0.0
        %1487 = vmatprep.subr.mxu0 0.0
        %1488 = vmatpush1.msra.mxu0 0.0
        %1489 = vmatprep.subr.mxu0 0.0
        %1490 = vmatpush1.msra.mxu0 0.0
        %1491 = vmatprep.subr.mxu0 0.0
        %1492 = vmatpush1.msra.mxu0 0.0
        %1493 = vmatprep.subr.mxu0 0.0
        %1494 = vmatpush1.msra.mxu0 0.0
        %1495 = vmatprep.subr.mxu0 0.0
        %1496 = vmatpush1.msra.mxu0 0.0
        %1497 = vmatprep.subr.mxu0 0.0
        %1498 = vmatpush1.msra.mxu0 0.0
        %1499 = vmatprep.subr.mxu0 0.0
        %1500 = vmatpush1.msra.mxu0 0.0
        %1501 = vmatprep.subr.mxu0 0.0
        %1502 = vmatpush1.msra.mxu0 0.0
        %1503 = vmatprep.subr.mxu0 0.0
        %1504 = vmatpush1.msra.mxu0 0.0
        %1505 = vmatprep.subr.mxu0 0.0
        %1506 = vmatpush1.msra.mxu0 0.0
        %1507 = vmatprep.subr.mxu0 0.0
        %1508 = vmatpush1.msra.mxu0 0.0
        %1509 = vmatprep.subr.mxu0 0.0
        %1510 = vmatpush1.msra.mxu0 0.0
        %1511 = vmatprep.subr.mxu0 0.0
        %1512 = vmatpush1.msra.mxu0 0.0
        %1513 = vmatprep.subr.mxu0 0.0
        %1514 = vmatpush1.msra.mxu0 0.0
        %1515 = vmatprep.subr.mxu0 0.0
        %1516 = vmatpush1.msra.mxu0 0.0
        %1517 = vmatprep.subr.mxu0 0.0
        %1518 = vmatpush1.msra.mxu0 0.0
        %1519 = vmatprep.subr.mxu0 0.0
        %1520 = vmatpush1.msra.mxu0 0.0
        %1521 = vmatprep.subr.mxu0 0.0
        %1522 = vmatpush1.msra.mxu0 0.0
        %1523 = vmatprep.subr.mxu0 0.0
        %1524 = vmatpush1.msra.mxu0 0.0
        %1525 = vmatprep.subr.mxu0 0.0
        %1526 = vmatpush1.msra.mxu0 0.0
        %1527 = vmatprep.mubr.f32.mxu0 0.0
        %1528 = vmatmul.mubr.f32.gmra.mrb[0].mxu0 %v1449
        %v1529 = vpop.f32.mrb[0].mxu0
        %v1530 = vadd.f32 0.0, %v1529
        %v1531 = vpop.f32.mrb[0].mxu0
        %1532 = vmatprep.mubr.f32.mxu0 0.0
        %1533 = vmatmul.mubr.f32.gmra.mrb[0].mxu0 %v1452
        %v1534 = vpop.f32.mrb[0].mxu0
        %v1535 = vadd.f32 0.0, %v1534
        %v1536 = vpop.f32.mrb[0].mxu0
        %1537 = vmatprep.mubr.f32.mxu0 0.0
        %1538 = vmatmul.mubr.f32.gmra.mrb[0].mxu0 %v1455
        %v1539 = vpop.f32.mrb[0].mxu0
        %v1540 = vadd.f32 0.0, %v1539
        %v1541 = vpop.f32.mrb[0].mxu0
        %1542 = vmatprep.mubr.f32.mxu0 0.0
        %1543 = vmatmul.mubr.f32.gmra.mrb[0].mxu0 %v1458
        %v1544 = vpop.f32.mrb[0].mxu0
        %v1545 = vadd.f32 0.0, %v1544
        %v1546 = vpop.f32.mrb[0].mxu0
        %1547 = vdwg.mxu0
        %v1548 = vadd.f32 %v1439, %v1530
        %v1549 = vadd.f32 %v1440, %v1535
        %v1550 = vadd.f32 %v1441, %v1540
        %v1551 = vadd.f32 %v1442, %v1545
        %v1552 = vand.u32 2147483647, %v1548
        %vm1553 = vcmp.le.f32.partialorder %v1552, 0.7853982
        %vm1554 = vcmp.lt.s32.totalorder %v1548, 0
        %v1555 = vand.u32 %v1548, 2139095040
        %v1556 = vshrl.u32 %v1555, 23
        %v1557 = vsub.s32 %v1556, 127
        %v1558 = vand.u32 2147483647, %v1548
        %v1559 = vand.u32 %v1558, 8388607
        %v1560 = vor.u32 %v1559, 8388608
        %v1561 = vsub.s32 0, %v1560
        %v1562 = vadd.s32 %v1557, 1
        %vm1563 = vcmp.gt.s32.totalorder %v1562, 0
        %v1564 = vsel %vm1563, %v1562, 0
        %v1565 = vshrl.u32 %v1564, 5
        %v1566 = vand.u32 %v1564, 31
        %v1567 = vsub.s32 32, %v1566
        %v1568 = vshrl.u32 683565275, %v1567
        %v1569 = vshll.u32 683565275, %v1566
        %v1570 = vshrl.u32 2475754826, %v1567
        %v1571 = vor.u32 %v1569, %v1570
        %v1572 = vshll.u32 2475754826, %v1566
        %v1573 = vshrl.u32 2131351028, %v1567
        %v1574 = vor.u32 %v1572, %v1573
        %v1575 = vshll.u32 2131351028, %v1566
        %v1576 = vshrl.u32 2102212464, %v1567
        %v1577 = vor.u32 %v1575, %v1576
        %v1578 = vshll.u32 2102212464, %v1566
        %v1579 = vshrl.u32 920167782, %v1567
        %v1580 = vor.u32 %v1578, %v1579
        %v1581 = vshll.u32 920167782, %v1566
        %v1582 = vshrl.u32 1326507024, %v1567
        %v1583 = vor.u32 %v1581, %v1582
        %vm1584 = vcmp.lt.s32.totalorder %v1565, 1
        %vm1585 = vcmp.lt.s32.totalorder %v1565, 2
        %vm1586 = vcmp.lt.s32.totalorder %v1565, 3
        %vm1587 = vcmp.lt.s32.totalorder %v1565, 4
        %v1588 = vsel %vm1584, %v1568, %v1571
        %v1589 = vsel %vm1587, %v1577, 2102212464
        %v1590 = vsel %vm1586, %v1574, %v1589
        %v1591 = vsel %vm1585, %v1588, %v1590
        %v1592 = vsel %vm1584, %v1571, %v1574
        %v1593 = vsel %vm1587, %v1580, 920167782
        %v1594 = vsel %vm1586, %v1577, %v1593
        %v1595 = vsel %vm1585, %v1592, %v1594
        %v1596 = vsel %vm1584, %v1574, %v1577
        %v1597 = vsel %vm1587, %v1583, 1326507024
        %v1598 = vsel %vm1586, %v1580, %v1597
        %v1599 = vsel %vm1585, %v1596, %v1598
        %v1600 = vshll.u32 %v1560, 8
        %v1601 = vmul.u32.u64.compose %v1600, %v1599
        %v1602 = vextract.low.u32 %v1601
        %v1603 = vextract.high.u32 %v1601
        %v1604 = vmul.u32.u64.compose %v1600, %v1595
        %v1605 = vextract.low.u32 %v1604
        %v1606 = vextract.high.u32 %v1604
        %v1607 = vmul.u32 %v1600, %v1591
        %v1608 = vadd.s32 %v1603, %v1605
        %vm1609 = vc.u32 %v1603, %v1605
        %v1610 = vadd.s32 %v1606, 1
        %v1611 = vsel %vm1609, %v1610, %v1606
        %v1612 = vadd.s32 %v1607, %v1611
        %v1613 = vadd.s32 %v1612, 536870912
        %v1614 = vshrl.u32 %v1613, 30
        %v1615 = vshll.u32 %v1614, 30
        %v1616 = vsub.s32 %v1612, %v1615
        %vm1617 = vcmp.lt.s32.totalorder %v1616, 0
        %v1618 = vsub.s32 0, %v1616
        %v1619 = vsel %vm1617, %v1618, %v1616
        %v1620 = vclz %v1619
        %v1621 = vsub.s32 %v1620, 2
        %vm1622 = vcmp.gt.s32.totalorder 0, %v1621
        %v1623 = vsel %vm1622, 0, %v1621
        %v1624 = vsub.s32 32, %v1623
        %v1625 = vshll.u32 %v1616, %v1623
        %v1626 = vshrl.u32 %v1608, %v1624
        %v1627 = vor.u32 %v1625, %v1626
        %v1628 = vsub.s32 4294967266, %v1623
        %v1629 = vadd.s32 %v1628, 127
        %v1630 = vshll.u32 %v1629, 23
        %v1631 = vor.u32 4788187, %v1630
        %v1632 = vand.u32 2147483647, %v1631
        %v1634 = vcvt.s32.f32 %v1627
        %v1635 = vmul.f32 %v1634, %v1632
        %v1636 = vxor.u32 %v1635, 2147483648
        %v1637 = vsel %vm1554, %v1636, %v1635
        %v1638 = vsub.s32 4, %v1614
        %v1639 = vsel %vm1554, %v1638, %v1614
        %v1640 = vsel %vm1553, %v1548, %v1637
        %v1641 = vsel %vm1553, 0, %v1639
        %v1642 = vcosq.f32.pop %v1640
        %v1643 = vsinq.f32.pop %v1640
        %vm1644 = vweird.f32 %v1548
        %v1645 = vadd.s32 %v1641, 3
        %v1646 = vand.u32 %v1645, 3
        %vm1647 = vcmp.lt.s32.totalorder %v1646, 2
        %vm1648 = vcmp.eq.s32.totalorder %v1646, 0
        %v1649 = vxor.u32 %v1643, 2147483648
        %v1650 = vsel %vm1648, %v1642, %v1649
        %vm1651 = vcmp.eq.s32.totalorder %v1646, 2
        %v1652 = vxor.u32 %v1642, 2147483648
        %v1653 = vsel %vm1651, %v1652, %v1643
        %v1654 = vsel %vm1647, %v1650, %v1653
        %v1655 = vsel %vm1644, nan, %v1654
        %v1656 = vand.u32 2147483647, %v1549
        %vm1657 = vcmp.le.f32.partialorder %v1656, 0.7853982
        %vm1658 = vcmp.lt.s32.totalorder %v1549, 0
        %v1659 = vand.u32 %v1549, 2139095040
        %v1660 = vshrl.u32 %v1659, 23
        %v1661 = vsub.s32 %v1660, 127
        %v1662 = vand.u32 2147483647, %v1549
        %v1663 = vand.u32 %v1662, 8388607
        %v1664 = vor.u32 %v1663, 8388608
        %v1665 = vsub.s32 0, %v1664
        %v1666 = vadd.s32 %v1661, 1
        %vm1667 = vcmp.gt.s32.totalorder %v1666, 0
        %v1668 = vsel %vm1667, %v1666, 0
        %v1669 = vshrl.u32 %v1668, 5
        %v1670 = vand.u32 %v1668, 31
        %v1671 = vsub.s32 32, %v1670
        %v1672 = vshrl.u32 683565275, %v1671
        %v1673 = vshll.u32 683565275, %v1670
        %v1674 = vshrl.u32 2475754826, %v1671
        %v1675 = vor.u32 %v1673, %v1674
        %v1676 = vshll.u32 2475754826, %v1670
        %v1677 = vshrl.u32 2131351028, %v1671
        %v1678 = vor.u32 %v1676, %v1677
        %v1679 = vshll.u32 2131351028, %v1670
        %v1680 = vshrl.u32 2102212464, %v1671
        %v1681 = vor.u32 %v1679, %v1680
        %v1682 = vshll.u32 2102212464, %v1670
        %v1683 = vshrl.u32 920167782, %v1671
        %v1684 = vor.u32 %v1682, %v1683
        %v1685 = vshll.u32 920167782, %v1670
        %v1686 = vshrl.u32 1326507024, %v1671
        %v1687 = vor.u32 %v1685, %v1686
        %vm1688 = vcmp.lt.s32.totalorder %v1669, 1
        %vm1689 = vcmp.lt.s32.totalorder %v1669, 2
        %vm1690 = vcmp.lt.s32.totalorder %v1669, 3
        %vm1691 = vcmp.lt.s32.totalorder %v1669, 4
        %v1692 = vsel %vm1688, %v1672, %v1675
        %v1693 = vsel %vm1691, %v1681, 2102212464
        %v1694 = vsel %vm1690, %v1678, %v1693
        %v1695 = vsel %vm1689, %v1692, %v1694
        %v1696 = vsel %vm1688, %v1675, %v1678
        %v1697 = vsel %vm1691, %v1684, 920167782
        %v1698 = vsel %vm1690, %v1681, %v1697
        %v1699 = vsel %vm1689, %v1696, %v1698
        %v1700 = vsel %vm1688, %v1678, %v1681
        %v1701 = vsel %vm1691, %v1687, 1326507024
        %v1702 = vsel %vm1690, %v1684, %v1701
        %v1703 = vsel %vm1689, %v1700, %v1702
        %v1704 = vshll.u32 %v1664, 8
        %v1705 = vmul.u32.u64.compose %v1704, %v1703
        %v1706 = vextract.low.u32 %v1705
        %v1707 = vextract.high.u32 %v1705
        %v1708 = vmul.u32.u64.compose %v1704, %v1699
        %v1709 = vextract.low.u32 %v1708
        %v1710 = vextract.high.u32 %v1708
        %v1711 = vmul.u32 %v1704, %v1695
        %v1712 = vadd.s32 %v1707, %v1709
        %vm1713 = vc.u32 %v1707, %v1709
        %v1714 = vadd.s32 %v1710, 1
        %v1715 = vsel %vm1713, %v1714, %v1710
        %v1716 = vadd.s32 %v1711, %v1715
        %v1717 = vadd.s32 %v1716, 536870912
        %v1718 = vshrl.u32 %v1717, 30
        %v1719 = vshll.u32 %v1718, 30
        %v1720 = vsub.s32 %v1716, %v1719
        %vm1721 = vcmp.lt.s32.totalorder %v1720, 0
        %v1722 = vsub.s32 0, %v1720
        %v1723 = vsel %vm1721, %v1722, %v1720
        %v1724 = vclz %v1723
        %v1725 = vsub.s32 %v1724, 2
        %vm1726 = vcmp.gt.s32.totalorder 0, %v1725
        %v1727 = vsel %vm1726, 0, %v1725
        %v1728 = vsub.s32 32, %v1727
        %v1729 = vshll.u32 %v1720, %v1727
        %v1730 = vshrl.u32 %v1712, %v1728
        %v1731 = vor.u32 %v1729, %v1730
        %v1732 = vsub.s32 4294967266, %v1727
        %v1733 = vadd.s32 %v1732, 127
        %v1734 = vshll.u32 %v1733, 23
        %v1735 = vor.u32 4788187, %v1734
        %v1736 = vand.u32 2147483647, %v1735
        %v1738 = vcvt.s32.f32 %v1731
        %v1739 = vmul.f32 %v1738, %v1736
        %v1740 = vxor.u32 %v1739, 2147483648
        %v1741 = vsel %vm1658, %v1740, %v1739
        %v1742 = vsub.s32 4, %v1718
        %v1743 = vsel %vm1658, %v1742, %v1718
        %v1744 = vsel %vm1657, %v1549, %v1741
        %v1745 = vsel %vm1657, 0, %v1743
        %v1746 = vcosq.f32.pop %v1744
        %v1747 = vsinq.f32.pop %v1744
        %vm1748 = vweird.f32 %v1549
        %v1749 = vadd.s32 %v1745, 3
        %v1750 = vand.u32 %v1749, 3
        %vm1751 = vcmp.lt.s32.totalorder %v1750, 2
        %vm1752 = vcmp.eq.s32.totalorder %v1750, 0
        %v1753 = vxor.u32 %v1747, 2147483648
        %v1754 = vsel %vm1752, %v1746, %v1753
        %vm1755 = vcmp.eq.s32.totalorder %v1750, 2
        %v1756 = vxor.u32 %v1746, 2147483648
        %v1757 = vsel %vm1755, %v1756, %v1747
        %v1758 = vsel %vm1751, %v1754, %v1757
        %v1759 = vsel %vm1748, nan, %v1758
        %v1760 = vand.u32 2147483647, %v1550
        %vm1761 = vcmp.le.f32.partialorder %v1760, 0.7853982
        %vm1762 = vcmp.lt.s32.totalorder %v1550, 0
        %v1763 = vand.u32 %v1550, 2139095040
        %v1764 = vshrl.u32 %v1763, 23
        %v1765 = vsub.s32 %v1764, 127
        %v1766 = vand.u32 2147483647, %v1550
        %v1767 = vand.u32 %v1766, 8388607
        %v1768 = vor.u32 %v1767, 8388608
        %v1769 = vsub.s32 0, %v1768
        %v1770 = vadd.s32 %v1765, 1
        %vm1771 = vcmp.gt.s32.totalorder %v1770, 0
        %v1772 = vsel %vm1771, %v1770, 0
        %v1773 = vshrl.u32 %v1772, 5
        %v1774 = vand.u32 %v1772, 31
        %v1775 = vsub.s32 32, %v1774
        %v1776 = vshrl.u32 683565275, %v1775
        %v1777 = vshll.u32 683565275, %v1774
        %v1778 = vshrl.u32 2475754826, %v1775
        %v1779 = vor.u32 %v1777, %v1778
        %v1780 = vshll.u32 2475754826, %v1774
        %v1781 = vshrl.u32 2131351028, %v1775
        %v1782 = vor.u32 %v1780, %v1781
        %v1783 = vshll.u32 2131351028, %v1774
        %v1784 = vshrl.u32 2102212464, %v1775
        %v1785 = vor.u32 %v1783, %v1784
        %v1786 = vshll.u32 2102212464, %v1774
        %v1787 = vshrl.u32 920167782, %v1775
        %v1788 = vor.u32 %v1786, %v1787
        %v1789 = vshll.u32 920167782, %v1774
        %v1790 = vshrl.u32 1326507024, %v1775
        %v1791 = vor.u32 %v1789, %v1790
        %vm1792 = vcmp.lt.s32.totalorder %v1773, 1
        %vm1793 = vcmp.lt.s32.totalorder %v1773, 2
        %vm1794 = vcmp.lt.s32.totalorder %v1773, 3
        %vm1795 = vcmp.lt.s32.totalorder %v1773, 4
        %v1796 = vsel %vm1792, %v1776, %v1779
        %v1797 = vsel %vm1795, %v1785, 2102212464
        %v1798 = vsel %vm1794, %v1782, %v1797
        %v1799 = vsel %vm1793, %v1796, %v1798
        %v1800 = vsel %vm1792, %v1779, %v1782
        %v1801 = vsel %vm1795, %v1788, 920167782
        %v1802 = vsel %vm1794, %v1785, %v1801
        %v1803 = vsel %vm1793, %v1800, %v1802
        %v1804 = vsel %vm1792, %v1782, %v1785
        %v1805 = vsel %vm1795, %v1791, 1326507024
        %v1806 = vsel %vm1794, %v1788, %v1805
        %v1807 = vsel %vm1793, %v1804, %v1806
        %v1808 = vshll.u32 %v1768, 8
        %v1809 = vmul.u32.u64.compose %v1808, %v1807
        %v1810 = vextract.low.u32 %v1809
        %v1811 = vextract.high.u32 %v1809
        %v1812 = vmul.u32.u64.compose %v1808, %v1803
        %v1813 = vextract.low.u32 %v1812
        %v1814 = vextract.high.u32 %v1812
        %v1815 = vmul.u32 %v1808, %v1799
        %v1816 = vadd.s32 %v1811, %v1813
        %vm1817 = vc.u32 %v1811, %v1813
        %v1818 = vadd.s32 %v1814, 1
        %v1819 = vsel %vm1817, %v1818, %v1814
        %v1820 = vadd.s32 %v1815, %v1819
        %v1821 = vadd.s32 %v1820, 536870912
        %v1822 = vshrl.u32 %v1821, 30
        %v1823 = vshll.u32 %v1822, 30
        %v1824 = vsub.s32 %v1820, %v1823
        %vm1825 = vcmp.lt.s32.totalorder %v1824, 0
        %v1826 = vsub.s32 0, %v1824
        %v1827 = vsel %vm1825, %v1826, %v1824
        %v1828 = vclz %v1827
        %v1829 = vsub.s32 %v1828, 2
        %vm1830 = vcmp.gt.s32.totalorder 0, %v1829
        %v1831 = vsel %vm1830, 0, %v1829
        %v1832 = vsub.s32 32, %v1831
        %v1833 = vshll.u32 %v1824, %v1831
        %v1834 = vshrl.u32 %v1816, %v1832
        %v1835 = vor.u32 %v1833, %v1834
        %v1836 = vsub.s32 4294967266, %v1831
        %v1837 = vadd.s32 %v1836, 127
        %v1838 = vshll.u32 %v1837, 23
        %v1839 = vor.u32 4788187, %v1838
        %v1840 = vand.u32 2147483647, %v1839
        %v1842 = vcvt.s32.f32 %v1835
        %v1843 = vmul.f32 %v1842, %v1840
        %v1844 = vxor.u32 %v1843, 2147483648
        %v1845 = vsel %vm1762, %v1844, %v1843
        %v1846 = vsub.s32 4, %v1822
        %v1847 = vsel %vm1762, %v1846, %v1822
        %v1848 = vsel %vm1761, %v1550, %v1845
        %v1849 = vsel %vm1761, 0, %v1847
        %v1850 = vcosq.f32.pop %v1848
        %v1851 = vsinq.f32.pop %v1848
        %vm1852 = vweird.f32 %v1550
        %v1853 = vadd.s32 %v1849, 3
        %v1854 = vand.u32 %v1853, 3
        %vm1855 = vcmp.lt.s32.totalorder %v1854, 2
        %vm1856 = vcmp.eq.s32.totalorder %v1854, 0
        %v1857 = vxor.u32 %v1851, 2147483648
        %v1858 = vsel %vm1856, %v1850, %v1857
        %vm1859 = vcmp.eq.s32.totalorder %v1854, 2
        %v1860 = vxor.u32 %v1850, 2147483648
        %v1861 = vsel %vm1859, %v1860, %v1851
        %v1862 = vsel %vm1855, %v1858, %v1861
        %v1863 = vsel %vm1852, nan, %v1862
        %v1864 = vand.u32 2147483647, %v1551
        %vm1865 = vcmp.le.f32.partialorder %v1864, 0.7853982
        %vm1866 = vcmp.lt.s32.totalorder %v1551, 0
        %v1867 = vand.u32 %v1551, 2139095040
        %v1868 = vshrl.u32 %v1867, 23
        %v1869 = vsub.s32 %v1868, 127
        %v1870 = vand.u32 2147483647, %v1551
        %v1871 = vand.u32 %v1870, 8388607
        %v1872 = vor.u32 %v1871, 8388608
        %v1873 = vsub.s32 0, %v1872
        %v1874 = vadd.s32 %v1869, 1
        %vm1875 = vcmp.gt.s32.totalorder %v1874, 0
        %v1876 = vsel %vm1875, %v1874, 0
        %v1877 = vshrl.u32 %v1876, 5
        %v1878 = vand.u32 %v1876, 31
        %v1879 = vsub.s32 32, %v1878
        %v1880 = vshrl.u32 683565275, %v1879
        %v1881 = vshll.u32 683565275, %v1878
        %v1882 = vshrl.u32 2475754826, %v1879
        %v1883 = vor.u32 %v1881, %v1882
        %v1884 = vshll.u32 2475754826, %v1878
        %v1885 = vshrl.u32 2131351028, %v1879
        %v1886 = vor.u32 %v1884, %v1885
        %v1887 = vshll.u32 2131351028, %v1878
        %v1888 = vshrl.u32 2102212464, %v1879
        %v1889 = vor.u32 %v1887, %v1888
        %v1890 = vshll.u32 2102212464, %v1878
        %v1891 = vshrl.u32 920167782, %v1879
        %v1892 = vor.u32 %v1890, %v1891
        %v1893 = vshll.u32 920167782, %v1878
        %v1894 = vshrl.u32 1326507024, %v1879
        %v1895 = vor.u32 %v1893, %v1894
        %vm1896 = vcmp.lt.s32.totalorder %v1877, 1
        %vm1897 = vcmp.lt.s32.totalorder %v1877, 2
        %vm1898 = vcmp.lt.s32.totalorder %v1877, 3
        %vm1899 = vcmp.lt.s32.totalorder %v1877, 4
        %v1900 = vsel %vm1896, %v1880, %v1883
        %v1901 = vsel %vm1899, %v1889, 2102212464
        %v1902 = vsel %vm1898, %v1886, %v1901
        %v1903 = vsel %vm1897, %v1900, %v1902
        %v1904 = vsel %vm1896, %v1883, %v1886
        %v1905 = vsel %vm1899, %v1892, 920167782
        %v1906 = vsel %vm1898, %v1889, %v1905
        %v1907 = vsel %vm1897, %v1904, %v1906
        %v1908 = vsel %vm1896, %v1886, %v1889
        %v1909 = vsel %vm1899, %v1895, 1326507024
        %v1910 = vsel %vm1898, %v1892, %v1909
        %v1911 = vsel %vm1897, %v1908, %v1910
        %v1912 = vshll.u32 %v1872, 8
        %v1913 = vmul.u32.u64.compose %v1912, %v1911
        %v1914 = vextract.low.u32 %v1913
        %v1915 = vextract.high.u32 %v1913
        %v1916 = vmul.u32.u64.compose %v1912, %v1907
        %v1917 = vextract.low.u32 %v1916
        %v1918 = vextract.high.u32 %v1916
        %v1919 = vmul.u32 %v1912, %v1903
        %v1920 = vadd.s32 %v1915, %v1917
        %vm1921 = vc.u32 %v1915, %v1917
        %v1922 = vadd.s32 %v1918, 1
        %v1923 = vsel %vm1921, %v1922, %v1918
        %v1924 = vadd.s32 %v1919, %v1923
        %v1925 = vadd.s32 %v1924, 536870912
        %v1926 = vshrl.u32 %v1925, 30
        %v1927 = vshll.u32 %v1926, 30
        %v1928 = vsub.s32 %v1924, %v1927
        %vm1929 = vcmp.lt.s32.totalorder %v1928, 0
        %v1930 = vsub.s32 0, %v1928
        %v1931 = vsel %vm1929, %v1930, %v1928
        %v1932 = vclz %v1931
        %v1933 = vsub.s32 %v1932, 2
        %vm1934 = vcmp.gt.s32.totalorder 0, %v1933
        %v1935 = vsel %vm1934, 0, %v1933
        %v1936 = vsub.s32 32, %v1935
        %v1937 = vshll.u32 %v1928, %v1935
        %v1938 = vshrl.u32 %v1920, %v1936
        %v1939 = vor.u32 %v1937, %v1938
        %v1940 = vsub.s32 4294967266, %v1935
        %v1941 = vadd.s32 %v1940, 127
        %v1942 = vshll.u32 %v1941, 23
        %v1943 = vor.u32 4788187, %v1942
        %v1944 = vand.u32 2147483647, %v1943
        %v1946 = vcvt.s32.f32 %v1939
        %v1947 = vmul.f32 %v1946, %v1944
        %v1948 = vxor.u32 %v1947, 2147483648
        %v1949 = vsel %vm1866, %v1948, %v1947
        %v1950 = vsub.s32 4, %v1926
        %v1951 = vsel %vm1866, %v1950, %v1926
        %v1952 = vsel %vm1865, %v1551, %v1949
        %v1953 = vsel %vm1865, 0, %v1951
        %v1954 = vcosq.f32.pop %v1952
        %v1955 = vsinq.f32.pop %v1952
        %vm1956 = vweird.f32 %v1551
        %v1957 = vadd.s32 %v1953, 3
        %v1958 = vand.u32 %v1957, 3
        %vm1959 = vcmp.lt.s32.totalorder %v1958, 2
        %vm1960 = vcmp.eq.s32.totalorder %v1958, 0
        %v1961 = vxor.u32 %v1955, 2147483648
        %v1962 = vsel %vm1960, %v1954, %v1961
        %vm1963 = vcmp.eq.s32.totalorder %v1958, 2
        %v1964 = vxor.u32 %v1954, 2147483648
        %v1965 = vsel %vm1963, %v1964, %v1955
        %v1966 = vsel %vm1959, %v1962, %v1965
        %v1967 = vsel %vm1956, nan, %v1966
        %v1968 = vld [vmem:[%s5] sm:$0xff]
        %v1969 = vld [vmem:[%s5 + $0x8] sm:$0xff]
        %v1970 = vld [vmem:[%s5 + $0x10] sm:$0xff]
        %v1971 = vld [vmem:[%s5 + $0x18] sm:$0xff]
        %v1972 = vld [vmem:[%s6] sm:$0xff]
        %v1973 = vld [vmem:[%s6 + $0x8] sm:$0xff]
        %v1974 = vld [vmem:[%s6 + $0x10] sm:$0xff]
        %v1975 = vld [vmem:[%s6 + $0x18] sm:$0xff]
        %1977 = vset.pattern.permute.xlu0 0
        %1978 = vperm.xlu0 %1977, %v1972
        %v1979 = vpop.permute.xlu0 %1978
        %1982 = vset.pattern.permute.xlu0 0
        %1983 = vperm.xlu0 %1982, %v1973
        %v1984 = vpop.permute.xlu0 %1983
        %1987 = vset.pattern.permute.xlu0 0
        %1988 = vperm.xlu0 %1987, %v1974
        %v1989 = vpop.permute.xlu0 %1988
        %1992 = vset.pattern.permute.xlu0 0
        %1993 = vperm.xlu0 %1992, %v1975
        %v1994 = vpop.permute.xlu0 %1993
        %vm1996 = vcmask 261120
        %v1998 = vsel %vm1996, %v1968, 0
        %v2001 = vsel %vm1996, %v1969, 0
        %v2004 = vsel %vm1996, %v1970, 0
        %v2007 = vsel %vm1996, %v1971, 0
        %2009 = vmatprep.subr.mxu0 0.0
        %2010 = vmatpush1.msra.mxu0 %v1655
        %2011 = vmatprep.subr.mxu0 0.0
        %2012 = vmatpush1.msra.mxu0 %v1759
        %2013 = vmatprep.subr.mxu0 0.0
        %2014 = vmatpush1.msra.mxu0 %v1863
        %2015 = vmatprep.subr.mxu0 0.0
        %2016 = vmatpush1.msra.mxu0 %v1967
        %2017 = vmatprep.subr.mxu0 0.0
        %2018 = vmatpush1.msra.mxu0 0.0
        %2019 = vmatprep.subr.mxu0 0.0
        %2020 = vmatpush1.msra.mxu0 0.0
        %2021 = vmatprep.subr.mxu0 0.0
        %2022 = vmatpush1.msra.mxu0 0.0
        %2023 = vmatprep.subr.mxu0 0.0
        %2024 = vmatpush1.msra.mxu0 0.0
        %2025 = vmatprep.subr.mxu0 0.0
        %2026 = vmatpush1.msra.mxu0 0.0
        %2027 = vmatprep.subr.mxu0 0.0
        %2028 = vmatpush1.msra.mxu0 0.0
        %2029 = vmatprep.subr.mxu0 0.0
        %2030 = vmatpush1.msra.mxu0 0.0
        %2031 = vmatprep.subr.mxu0 0.0
        %2032 = vmatpush1.msra.mxu0 0.0
        %2033 = vmatprep.subr.mxu0 0.0
        %2034 = vmatpush1.msra.mxu0 0.0
        %2035 = vmatprep.subr.mxu0 0.0
        %2036 = vmatpush1.msra.mxu0 0.0
        %2037 = vmatprep.subr.mxu0 0.0
        %2038 = vmatpush1.msra.mxu0 0.0
        %2039 = vmatprep.subr.mxu0 0.0
        %2040 = vmatpush1.msra.mxu0 0.0
        %2041 = vmatprep.subr.mxu0 0.0
        %2042 = vmatpush1.msra.mxu0 0.0
        %2043 = vmatprep.subr.mxu0 0.0
        %2044 = vmatpush1.msra.mxu0 0.0
        %2045 = vmatprep.subr.mxu0 0.0
        %2046 = vmatpush1.msra.mxu0 0.0
        %2047 = vmatprep.subr.mxu0 0.0
        %2048 = vmatpush1.msra.mxu0 0.0
        %2049 = vmatprep.subr.mxu0 0.0
        %2050 = vmatpush1.msra.mxu0 0.0
        %2051 = vmatprep.subr.mxu0 0.0
        %2052 = vmatpush1.msra.mxu0 0.0
        %2053 = vmatprep.subr.mxu0 0.0
        %2054 = vmatpush1.msra.mxu0 0.0
        %2055 = vmatprep.subr.mxu0 0.0
        %2056 = vmatpush1.msra.mxu0 0.0
        %2057 = vmatprep.subr.mxu0 0.0
        %2058 = vmatpush1.msra.mxu0 0.0
        %2059 = vmatprep.subr.mxu0 0.0
        %2060 = vmatpush1.msra.mxu0 0.0
        %2061 = vmatprep.subr.mxu0 0.0
        %2062 = vmatpush1.msra.mxu0 0.0
        %2063 = vmatprep.subr.mxu0 0.0
        %2064 = vmatpush1.msra.mxu0 0.0
        %2065 = vmatprep.subr.mxu0 0.0
        %2066 = vmatpush1.msra.mxu0 0.0
        %2067 = vmatprep.subr.mxu0 0.0
        %2068 = vmatpush1.msra.mxu0 0.0
        %2069 = vmatprep.subr.mxu0 0.0
        %2070 = vmatpush1.msra.mxu0 0.0
        %2071 = vmatprep.subr.mxu0 0.0
        %2072 = vmatpush1.msra.mxu0 0.0
        %2073 = vmatprep.mubr.f32.mxu0 0.0
        %2074 = vmatmul.mubr.f32.gmra.mrb[0].mxu0 %v1998
        %v2075 = vpop.f32.mrb[0].mxu0
        %v2076 = vadd.f32 %v1979, %v2075
        %v2077 = vpop.f32.mrb[0].mxu0
        %2078 = vmatprep.mubr.f32.mxu0 0.0
        %2079 = vmatmul.mubr.f32.gmra.mrb[0].mxu0 %v2001
        %v2080 = vpop.f32.mrb[0].mxu0
        %v2081 = vadd.f32 %v1984, %v2080
        %v2082 = vpop.f32.mrb[0].mxu0
        %2083 = vmatprep.mubr.f32.mxu0 0.0
        %2084 = vmatmul.mubr.f32.gmra.mrb[0].mxu0 %v2004
        %v2085 = vpop.f32.mrb[0].mxu0
        %v2086 = vadd.f32 %v1989, %v2085
        %v2087 = vpop.f32.mrb[0].mxu0
        %2088 = vmatprep.mubr.f32.mxu0 0.0
        %2089 = vmatmul.mubr.f32.gmra.mrb[0].mxu0 %v2007
        %v2090 = vpop.f32.mrb[0].mxu0
        %v2091 = vadd.f32 %v1994, %v2090
        %v2092 = vpop.f32.mrb[0].mxu0
        %2093 = vdwg.mxu0
        %v2094 = vand.u32 2147483647, %v2076
        %vm2095 = vcmp.le.f32.partialorder %v2094, 0.7853982
        %vm2096 = vcmp.lt.s32.totalorder %v2076, 0
        %v2097 = vand.u32 %v2076, 2139095040
        %v2098 = vshrl.u32 %v2097, 23
        %v2099 = vsub.s32 %v2098, 127
        %v2100 = vand.u32 2147483647, %v2076
        %v2101 = vand.u32 %v2100, 8388607
        %v2102 = vor.u32 %v2101, 8388608
        %v2103 = vsub.s32 0, %v2102
        %v2104 = vadd.s32 %v2099, 1
        %vm2105 = vcmp.gt.s32.totalorder %v2104, 0
        %v2106 = vsel %vm2105, %v2104, 0
        %v2107 = vshrl.u32 %v2106, 5
        %v2108 = vand.u32 %v2106, 31
        %v2109 = vsub.s32 32, %v2108
        %v2110 = vshrl.u32 683565275, %v2109
        %v2111 = vshll.u32 683565275, %v2108
        %v2112 = vshrl.u32 2475754826, %v2109
        %v2113 = vor.u32 %v2111, %v2112
        %v2114 = vshll.u32 2475754826, %v2108
        %v2115 = vshrl.u32 2131351028, %v2109
        %v2116 = vor.u32 %v2114, %v2115
        %v2117 = vshll.u32 2131351028, %v2108
        %v2118 = vshrl.u32 2102212464, %v2109
        %v2119 = vor.u32 %v2117, %v2118
        %v2120 = vshll.u32 2102212464, %v2108
        %v2121 = vshrl.u32 920167782, %v2109
        %v2122 = vor.u32 %v2120, %v2121
        %v2123 = vshll.u32 920167782, %v2108
        %v2124 = vshrl.u32 1326507024, %v2109
        %v2125 = vor.u32 %v2123, %v2124
        %vm2126 = vcmp.lt.s32.totalorder %v2107, 1
        %vm2127 = vcmp.lt.s32.totalorder %v2107, 2
        %vm2128 = vcmp.lt.s32.totalorder %v2107, 3
        %vm2129 = vcmp.lt.s32.totalorder %v2107, 4
        %v2130 = vsel %vm2126, %v2110, %v2113
        %v2131 = vsel %vm2129, %v2119, 2102212464
        %v2132 = vsel %vm2128, %v2116, %v2131
        %v2133 = vsel %vm2127, %v2130, %v2132
        %v2134 = vsel %vm2126, %v2113, %v2116
        %v2135 = vsel %vm2129, %v2122, 920167782
        %v2136 = vsel %vm2128, %v2119, %v2135
        %v2137 = vsel %vm2127, %v2134, %v2136
        %v2138 = vsel %vm2126, %v2116, %v2119
        %v2139 = vsel %vm2129, %v2125, 1326507024
        %v2140 = vsel %vm2128, %v2122, %v2139
        %v2141 = vsel %vm2127, %v2138, %v2140
        %v2142 = vshll.u32 %v2102, 8
        %v2143 = vmul.u32.u64.compose %v2142, %v2141
        %v2144 = vextract.low.u32 %v2143
        %v2145 = vextract.high.u32 %v2143
        %v2146 = vmul.u32.u64.compose %v2142, %v2137
        %v2147 = vextract.low.u32 %v2146
        %v2148 = vextract.high.u32 %v2146
        %v2149 = vmul.u32 %v2142, %v2133
        %v2150 = vadd.s32 %v2145, %v2147
        %vm2151 = vc.u32 %v2145, %v2147
        %v2152 = vadd.s32 %v2148, 1
        %v2153 = vsel %vm2151, %v2152, %v2148
        %v2154 = vadd.s32 %v2149, %v2153
        %v2155 = vadd.s32 %v2154, 536870912
        %v2156 = vshrl.u32 %v2155, 30
        %v2157 = vshll.u32 %v2156, 30
        %v2158 = vsub.s32 %v2154, %v2157
        %vm2159 = vcmp.lt.s32.totalorder %v2158, 0
        %v2160 = vsub.s32 0, %v2158
        %v2161 = vsel %vm2159, %v2160, %v2158
        %v2162 = vclz %v2161
        %v2163 = vsub.s32 %v2162, 2
        %vm2164 = vcmp.gt.s32.totalorder 0, %v2163
        %v2165 = vsel %vm2164, 0, %v2163
        %v2166 = vsub.s32 32, %v2165
        %v2167 = vshll.u32 %v2158, %v2165
        %v2168 = vshrl.u32 %v2150, %v2166
        %v2169 = vor.u32 %v2167, %v2168
        %v2170 = vsub.s32 4294967266, %v2165
        %v2171 = vadd.s32 %v2170, 127
        %v2172 = vshll.u32 %v2171, 23
        %v2173 = vor.u32 4788187, %v2172
        %v2174 = vand.u32 2147483647, %v2173
        %v2176 = vcvt.s32.f32 %v2169
        %v2177 = vmul.f32 %v2176, %v2174
        %v2178 = vxor.u32 %v2177, 2147483648
        %v2179 = vsel %vm2096, %v2178, %v2177
        %v2180 = vsub.s32 4, %v2156
        %v2181 = vsel %vm2096, %v2180, %v2156
        %v2182 = vsel %vm2095, %v2076, %v2179
        %v2183 = vsel %vm2095, 0, %v2181
        %v2184 = vcosq.f32.pop %v2182
        %v2185 = vsinq.f32.pop %v2182
        %vm2186 = vweird.f32 %v2076
        %v2187 = vadd.s32 %v2183, 3
        %v2188 = vand.u32 %v2187, 3
        %vm2189 = vcmp.lt.s32.totalorder %v2188, 2
        %vm2190 = vcmp.eq.s32.totalorder %v2188, 0
        %v2191 = vxor.u32 %v2185, 2147483648
        %v2192 = vsel %vm2190, %v2184, %v2191
        %vm2193 = vcmp.eq.s32.totalorder %v2188, 2
        %v2194 = vxor.u32 %v2184, 2147483648
        %v2195 = vsel %vm2193, %v2194, %v2185
        %v2196 = vsel %vm2189, %v2192, %v2195
        %v2197 = vsel %vm2186, nan, %v2196
        %v2198 = vand.u32 2147483647, %v2081
        %vm2199 = vcmp.le.f32.partialorder %v2198, 0.7853982
        %vm2200 = vcmp.lt.s32.totalorder %v2081, 0
        %v2201 = vand.u32 %v2081, 2139095040
        %v2202 = vshrl.u32 %v2201, 23
        %v2203 = vsub.s32 %v2202, 127
        %v2204 = vand.u32 2147483647, %v2081
        %v2205 = vand.u32 %v2204, 8388607
        %v2206 = vor.u32 %v2205, 8388608
        %v2207 = vsub.s32 0, %v2206
        %v2208 = vadd.s32 %v2203, 1
        %vm2209 = vcmp.gt.s32.totalorder %v2208, 0
        %v2210 = vsel %vm2209, %v2208, 0
        %v2211 = vshrl.u32 %v2210, 5
        %v2212 = vand.u32 %v2210, 31
        %v2213 = vsub.s32 32, %v2212
        %v2214 = vshrl.u32 683565275, %v2213
        %v2215 = vshll.u32 683565275, %v2212
        %v2216 = vshrl.u32 2475754826, %v2213
        %v2217 = vor.u32 %v2215, %v2216
        %v2218 = vshll.u32 2475754826, %v2212
        %v2219 = vshrl.u32 2131351028, %v2213
        %v2220 = vor.u32 %v2218, %v2219
        %v2221 = vshll.u32 2131351028, %v2212
        %v2222 = vshrl.u32 2102212464, %v2213
        %v2223 = vor.u32 %v2221, %v2222
        %v2224 = vshll.u32 2102212464, %v2212
        %v2225 = vshrl.u32 920167782, %v2213
        %v2226 = vor.u32 %v2224, %v2225
        %v2227 = vshll.u32 920167782, %v2212
        %v2228 = vshrl.u32 1326507024, %v2213
        %v2229 = vor.u32 %v2227, %v2228
        %vm2230 = vcmp.lt.s32.totalorder %v2211, 1
        %vm2231 = vcmp.lt.s32.totalorder %v2211, 2
        %vm2232 = vcmp.lt.s32.totalorder %v2211, 3
        %vm2233 = vcmp.lt.s32.totalorder %v2211, 4
        %v2234 = vsel %vm2230, %v2214, %v2217
        %v2235 = vsel %vm2233, %v2223, 2102212464
        %v2236 = vsel %vm2232, %v2220, %v2235
        %v2237 = vsel %vm2231, %v2234, %v2236
        %v2238 = vsel %vm2230, %v2217, %v2220
        %v2239 = vsel %vm2233, %v2226, 920167782
        %v2240 = vsel %vm2232, %v2223, %v2239
        %v2241 = vsel %vm2231, %v2238, %v2240
        %v2242 = vsel %vm2230, %v2220, %v2223
        %v2243 = vsel %vm2233, %v2229, 1326507024
        %v2244 = vsel %vm2232, %v2226, %v2243
        %v2245 = vsel %vm2231, %v2242, %v2244
        %v2246 = vshll.u32 %v2206, 8
        %v2247 = vmul.u32.u64.compose %v2246, %v2245
        %v2248 = vextract.low.u32 %v2247
        %v2249 = vextract.high.u32 %v2247
        %v2250 = vmul.u32.u64.compose %v2246, %v2241
        %v2251 = vextract.low.u32 %v2250
        %v2252 = vextract.high.u32 %v2250
        %v2253 = vmul.u32 %v2246, %v2237
        %v2254 = vadd.s32 %v2249, %v2251
        %vm2255 = vc.u32 %v2249, %v2251
        %v2256 = vadd.s32 %v2252, 1
        %v2257 = vsel %vm2255, %v2256, %v2252
        %v2258 = vadd.s32 %v2253, %v2257
        %v2259 = vadd.s32 %v2258, 536870912
        %v2260 = vshrl.u32 %v2259, 30
        %v2261 = vshll.u32 %v2260, 30
        %v2262 = vsub.s32 %v2258, %v2261
        %vm2263 = vcmp.lt.s32.totalorder %v2262, 0
        %v2264 = vsub.s32 0, %v2262
        %v2265 = vsel %vm2263, %v2264, %v2262
        %v2266 = vclz %v2265
        %v2267 = vsub.s32 %v2266, 2
        %vm2268 = vcmp.gt.s32.totalorder 0, %v2267
        %v2269 = vsel %vm2268, 0, %v2267
        %v2270 = vsub.s32 32, %v2269
        %v2271 = vshll.u32 %v2262, %v2269
        %v2272 = vshrl.u32 %v2254, %v2270
        %v2273 = vor.u32 %v2271, %v2272
        %v2274 = vsub.s32 4294967266, %v2269
        %v2275 = vadd.s32 %v2274, 127
        %v2276 = vshll.u32 %v2275, 23
        %v2277 = vor.u32 4788187, %v2276
        %v2278 = vand.u32 2147483647, %v2277
        %v2280 = vcvt.s32.f32 %v2273
        %v2281 = vmul.f32 %v2280, %v2278
        %v2282 = vxor.u32 %v2281, 2147483648
        %v2283 = vsel %vm2200, %v2282, %v2281
        %v2284 = vsub.s32 4, %v2260
        %v2285 = vsel %vm2200, %v2284, %v2260
        %v2286 = vsel %vm2199, %v2081, %v2283
        %v2287 = vsel %vm2199, 0, %v2285
        %v2288 = vcosq.f32.pop %v2286
        %v2289 = vsinq.f32.pop %v2286
        %vm2290 = vweird.f32 %v2081
        %v2291 = vadd.s32 %v2287, 3
        %v2292 = vand.u32 %v2291, 3
        %vm2293 = vcmp.lt.s32.totalorder %v2292, 2
        %vm2294 = vcmp.eq.s32.totalorder %v2292, 0
        %v2295 = vxor.u32 %v2289, 2147483648
        %v2296 = vsel %vm2294, %v2288, %v2295
        %vm2297 = vcmp.eq.s32.totalorder %v2292, 2
        %v2298 = vxor.u32 %v2288, 2147483648
        %v2299 = vsel %vm2297, %v2298, %v2289
        %v2300 = vsel %vm2293, %v2296, %v2299
        %v2301 = vsel %vm2290, nan, %v2300
        %v2302 = vand.u32 2147483647, %v2086
        %vm2303 = vcmp.le.f32.partialorder %v2302, 0.7853982
        %vm2304 = vcmp.lt.s32.totalorder %v2086, 0
        %v2305 = vand.u32 %v2086, 2139095040
        %v2306 = vshrl.u32 %v2305, 23
        %v2307 = vsub.s32 %v2306, 127
        %v2308 = vand.u32 2147483647, %v2086
        %v2309 = vand.u32 %v2308, 8388607
        %v2310 = vor.u32 %v2309, 8388608
        %v2311 = vsub.s32 0, %v2310
        %v2312 = vadd.s32 %v2307, 1
        %vm2313 = vcmp.gt.s32.totalorder %v2312, 0
        %v2314 = vsel %vm2313, %v2312, 0
        %v2315 = vshrl.u32 %v2314, 5
        %v2316 = vand.u32 %v2314, 31
        %v2317 = vsub.s32 32, %v2316
        %v2318 = vshrl.u32 683565275, %v2317
        %v2319 = vshll.u32 683565275, %v2316
        %v2320 = vshrl.u32 2475754826, %v2317
        %v2321 = vor.u32 %v2319, %v2320
        %v2322 = vshll.u32 2475754826, %v2316
        %v2323 = vshrl.u32 2131351028, %v2317
        %v2324 = vor.u32 %v2322, %v2323
        %v2325 = vshll.u32 2131351028, %v2316
        %v2326 = vshrl.u32 2102212464, %v2317
        %v2327 = vor.u32 %v2325, %v2326
        %v2328 = vshll.u32 2102212464, %v2316
        %v2329 = vshrl.u32 920167782, %v2317
        %v2330 = vor.u32 %v2328, %v2329
        %v2331 = vshll.u32 920167782, %v2316
        %v2332 = vshrl.u32 1326507024, %v2317
        %v2333 = vor.u32 %v2331, %v2332
        %vm2334 = vcmp.lt.s32.totalorder %v2315, 1
        %vm2335 = vcmp.lt.s32.totalorder %v2315, 2
        %vm2336 = vcmp.lt.s32.totalorder %v2315, 3
        %vm2337 = vcmp.lt.s32.totalorder %v2315, 4
        %v2338 = vsel %vm2334, %v2318, %v2321
        %v2339 = vsel %vm2337, %v2327, 2102212464
        %v2340 = vsel %vm2336, %v2324, %v2339
        %v2341 = vsel %vm2335, %v2338, %v2340
        %v2342 = vsel %vm2334, %v2321, %v2324
        %v2343 = vsel %vm2337, %v2330, 920167782
        %v2344 = vsel %vm2336, %v2327, %v2343
        %v2345 = vsel %vm2335, %v2342, %v2344
        %v2346 = vsel %vm2334, %v2324, %v2327
        %v2347 = vsel %vm2337, %v2333, 1326507024
        %v2348 = vsel %vm2336, %v2330, %v2347
        %v2349 = vsel %vm2335, %v2346, %v2348
        %v2350 = vshll.u32 %v2310, 8
        %v2351 = vmul.u32.u64.compose %v2350, %v2349
        %v2352 = vextract.low.u32 %v2351
        %v2353 = vextract.high.u32 %v2351
        %v2354 = vmul.u32.u64.compose %v2350, %v2345
        %v2355 = vextract.low.u32 %v2354
        %v2356 = vextract.high.u32 %v2354
        %v2357 = vmul.u32 %v2350, %v2341
        %v2358 = vadd.s32 %v2353, %v2355
        %vm2359 = vc.u32 %v2353, %v2355
        %v2360 = vadd.s32 %v2356, 1
        %v2361 = vsel %vm2359, %v2360, %v2356
        %v2362 = vadd.s32 %v2357, %v2361
        %v2363 = vadd.s32 %v2362, 536870912
        %v2364 = vshrl.u32 %v2363, 30
        %v2365 = vshll.u32 %v2364, 30
        %v2366 = vsub.s32 %v2362, %v2365
        %vm2367 = vcmp.lt.s32.totalorder %v2366, 0
        %v2368 = vsub.s32 0, %v2366
        %v2369 = vsel %vm2367, %v2368, %v2366
        %v2370 = vclz %v2369
        %v2371 = vsub.s32 %v2370, 2
        %vm2372 = vcmp.gt.s32.totalorder 0, %v2371
        %v2373 = vsel %vm2372, 0, %v2371
        %v2374 = vsub.s32 32, %v2373
        %v2375 = vshll.u32 %v2366, %v2373
        %v2376 = vshrl.u32 %v2358, %v2374
        %v2377 = vor.u32 %v2375, %v2376
        %v2378 = vsub.s32 4294967266, %v2373
        %v2379 = vadd.s32 %v2378, 127
        %v2380 = vshll.u32 %v2379, 23
        %v2381 = vor.u32 4788187, %v2380
        %v2382 = vand.u32 2147483647, %v2381
        %v2384 = vcvt.s32.f32 %v2377
        %v2385 = vmul.f32 %v2384, %v2382
        %v2386 = vxor.u32 %v2385, 2147483648
        %v2387 = vsel %vm2304, %v2386, %v2385
        %v2388 = vsub.s32 4, %v2364
        %v2389 = vsel %vm2304, %v2388, %v2364
        %v2390 = vsel %vm2303, %v2086, %v2387
        %v2391 = vsel %vm2303, 0, %v2389
        %v2392 = vcosq.f32.pop %v2390
        %v2393 = vsinq.f32.pop %v2390
        %vm2394 = vweird.f32 %v2086
        %v2395 = vadd.s32 %v2391, 3
        %v2396 = vand.u32 %v2395, 3
        %vm2397 = vcmp.lt.s32.totalorder %v2396, 2
        %vm2398 = vcmp.eq.s32.totalorder %v2396, 0
        %v2399 = vxor.u32 %v2393, 2147483648
        %v2400 = vsel %vm2398, %v2392, %v2399
        %vm2401 = vcmp.eq.s32.totalorder %v2396, 2
        %v2402 = vxor.u32 %v2392, 2147483648
        %v2403 = vsel %vm2401, %v2402, %v2393
        %v2404 = vsel %vm2397, %v2400, %v2403
        %v2405 = vsel %vm2394, nan, %v2404
        %v2406 = vand.u32 2147483647, %v2091
        %vm2407 = vcmp.le.f32.partialorder %v2406, 0.7853982
        %vm2408 = vcmp.lt.s32.totalorder %v2091, 0
        %v2409 = vand.u32 %v2091, 2139095040
        %v2410 = vshrl.u32 %v2409, 23
        %v2411 = vsub.s32 %v2410, 127
        %v2412 = vand.u32 2147483647, %v2091
        %v2413 = vand.u32 %v2412, 8388607
        %v2414 = vor.u32 %v2413, 8388608
        %v2415 = vsub.s32 0, %v2414
        %v2416 = vadd.s32 %v2411, 1
        %vm2417 = vcmp.gt.s32.totalorder %v2416, 0
        %v2418 = vsel %vm2417, %v2416, 0
        %v2419 = vshrl.u32 %v2418, 5
        %v2420 = vand.u32 %v2418, 31
        %v2421 = vsub.s32 32, %v2420
        %v2422 = vshrl.u32 683565275, %v2421
        %v2423 = vshll.u32 683565275, %v2420
        %v2424 = vshrl.u32 2475754826, %v2421
        %v2425 = vor.u32 %v2423, %v2424
        %v2426 = vshll.u32 2475754826, %v2420
        %v2427 = vshrl.u32 2131351028, %v2421
        %v2428 = vor.u32 %v2426, %v2427
        %v2429 = vshll.u32 2131351028, %v2420
        %v2430 = vshrl.u32 2102212464, %v2421
        %v2431 = vor.u32 %v2429, %v2430
        %v2432 = vshll.u32 2102212464, %v2420
        %v2433 = vshrl.u32 920167782, %v2421
        %v2434 = vor.u32 %v2432, %v2433
        %v2435 = vshll.u32 920167782, %v2420
        %v2436 = vshrl.u32 1326507024, %v2421
        %v2437 = vor.u32 %v2435, %v2436
        %vm2438 = vcmp.lt.s32.totalorder %v2419, 1
        %vm2439 = vcmp.lt.s32.totalorder %v2419, 2
        %vm2440 = vcmp.lt.s32.totalorder %v2419, 3
        %vm2441 = vcmp.lt.s32.totalorder %v2419, 4
        %v2442 = vsel %vm2438, %v2422, %v2425
        %v2443 = vsel %vm2441, %v2431, 2102212464
        %v2444 = vsel %vm2440, %v2428, %v2443
        %v2445 = vsel %vm2439, %v2442, %v2444
        %v2446 = vsel %vm2438, %v2425, %v2428
        %v2447 = vsel %vm2441, %v2434, 920167782
        %v2448 = vsel %vm2440, %v2431, %v2447
        %v2449 = vsel %vm2439, %v2446, %v2448
        %v2450 = vsel %vm2438, %v2428, %v2431
        %v2451 = vsel %vm2441, %v2437, 1326507024
        %v2452 = vsel %vm2440, %v2434, %v2451
        %v2453 = vsel %vm2439, %v2450, %v2452
        %v2454 = vshll.u32 %v2414, 8
        %v2455 = vmul.u32.u64.compose %v2454, %v2453
        %v2456 = vextract.low.u32 %v2455
        %v2457 = vextract.high.u32 %v2455
        %v2458 = vmul.u32.u64.compose %v2454, %v2449
        %v2459 = vextract.low.u32 %v2458
        %v2460 = vextract.high.u32 %v2458
        %v2461 = vmul.u32 %v2454, %v2445
        %v2462 = vadd.s32 %v2457, %v2459
        %vm2463 = vc.u32 %v2457, %v2459
        %v2464 = vadd.s32 %v2460, 1
        %v2465 = vsel %vm2463, %v2464, %v2460
        %v2466 = vadd.s32 %v2461, %v2465
        %v2467 = vadd.s32 %v2466, 536870912
        %v2468 = vshrl.u32 %v2467, 30
        %v2469 = vshll.u32 %v2468, 30
        %v2470 = vsub.s32 %v2466, %v2469
        %vm2471 = vcmp.lt.s32.totalorder %v2470, 0
        %v2472 = vsub.s32 0, %v2470
        %v2473 = vsel %vm2471, %v2472, %v2470
        %v2474 = vclz %v2473
        %v2475 = vsub.s32 %v2474, 2
        %vm2476 = vcmp.gt.s32.totalorder 0, %v2475
        %v2477 = vsel %vm2476, 0, %v2475
        %v2478 = vsub.s32 32, %v2477
        %v2479 = vshll.u32 %v2470, %v2477
        %v2480 = vshrl.u32 %v2462, %v2478
        %v2481 = vor.u32 %v2479, %v2480
        %v2482 = vsub.s32 4294967266, %v2477
        %v2483 = vadd.s32 %v2482, 127
        %v2484 = vshll.u32 %v2483, 23
        %v2485 = vor.u32 4788187, %v2484
        %v2486 = vand.u32 2147483647, %v2485
        %v2488 = vcvt.s32.f32 %v2481
        %v2489 = vmul.f32 %v2488, %v2486
        %v2490 = vxor.u32 %v2489, 2147483648
        %v2491 = vsel %vm2408, %v2490, %v2489
        %v2492 = vsub.s32 4, %v2468
        %v2493 = vsel %vm2408, %v2492, %v2468
        %v2494 = vsel %vm2407, %v2091, %v2491
        %v2495 = vsel %vm2407, 0, %v2493
        %v2496 = vcosq.f32.pop %v2494
        %v2497 = vsinq.f32.pop %v2494
        %vm2498 = vweird.f32 %v2091
        %v2499 = vadd.s32 %v2495, 3
        %v2500 = vand.u32 %v2499, 3
        %vm2501 = vcmp.lt.s32.totalorder %v2500, 2
        %vm2502 = vcmp.eq.s32.totalorder %v2500, 0
        %v2503 = vxor.u32 %v2497, 2147483648
        %v2504 = vsel %vm2502, %v2496, %v2503
        %vm2505 = vcmp.eq.s32.totalorder %v2500, 2
        %v2506 = vxor.u32 %v2496, 2147483648
        %v2507 = vsel %vm2505, %v2506, %v2497
        %v2508 = vsel %vm2501, %v2504, %v2507
        %v2509 = vsel %vm2498, nan, %v2508
        %v2510 = vld [vmem:[%s7] sm:$0x3]
        %v2511 = vld [vmem:[%s8] sm:$0x3]
        %2513 = vset.pattern.permute.xlu0 0
        %2514 = vperm.xlu0 %2513, %v2511
        %v2515 = vpop.permute.xlu0 %2514
        %v2518 = vsel %vm1996, %v2510, 0
        %2520 = vmatprep.subr.mxu0 0.0
        %2521 = vmatpush1.msra.mxu0 %v2197
        %2522 = vmatprep.subr.mxu0 0.0
        %2523 = vmatpush1.msra.mxu0 %v2301
        %2524 = vmatprep.subr.mxu0 0.0
        %2525 = vmatpush1.msra.mxu0 %v2405
        %2526 = vmatprep.subr.mxu0 0.0
        %2527 = vmatpush1.msra.mxu0 %v2509
        %2528 = vmatprep.subr.mxu0 0.0
        %2529 = vmatpush1.msra.mxu0 0.0
        %2530 = vmatprep.subr.mxu0 0.0
        %2531 = vmatpush1.msra.mxu0 0.0
        %2532 = vmatprep.subr.mxu0 0.0
        %2533 = vmatpush1.msra.mxu0 0.0
        %2534 = vmatprep.subr.mxu0 0.0
        %2535 = vmatpush1.msra.mxu0 0.0
        %2536 = vmatprep.subr.mxu0 0.0
        %2537 = vmatpush1.msra.mxu0 0.0
        %2538 = vmatprep.subr.mxu0 0.0
        %2539 = vmatpush1.msra.mxu0 0.0
        %2540 = vmatprep.subr.mxu0 0.0
        %2541 = vmatpush1.msra.mxu0 0.0
        %2542 = vmatprep.subr.mxu0 0.0
        %2543 = vmatpush1.msra.mxu0 0.0
        %2544 = vmatprep.subr.mxu0 0.0
        %2545 = vmatpush1.msra.mxu0 0.0
        %2546 = vmatprep.subr.mxu0 0.0
        %2547 = vmatpush1.msra.mxu0 0.0
        %2548 = vmatprep.subr.mxu0 0.0
        %2549 = vmatpush1.msra.mxu0 0.0
        %2550 = vmatprep.subr.mxu0 0.0
        %2551 = vmatpush1.msra.mxu0 0.0
        %2552 = vmatprep.subr.mxu0 0.0
        %2553 = vmatpush1.msra.mxu0 0.0
        %2554 = vmatprep.subr.mxu0 0.0
        %2555 = vmatpush1.msra.mxu0 0.0
        %2556 = vmatprep.subr.mxu0 0.0
        %2557 = vmatpush1.msra.mxu0 0.0
        %2558 = vmatprep.subr.mxu0 0.0
        %2559 = vmatpush1.msra.mxu0 0.0
        %2560 = vmatprep.subr.mxu0 0.0
        %2561 = vmatpush1.msra.mxu0 0.0
        %2562 = vmatprep.subr.mxu0 0.0
        %2563 = vmatpush1.msra.mxu0 0.0
        %2564 = vmatprep.subr.mxu0 0.0
        %2565 = vmatpush1.msra.mxu0 0.0
        %2566 = vmatprep.subr.mxu0 0.0
        %2567 = vmatpush1.msra.mxu0 0.0
        %2568 = vmatprep.subr.mxu0 0.0
        %2569 = vmatpush1.msra.mxu0 0.0
        %2570 = vmatprep.subr.mxu0 0.0
        %2571 = vmatpush1.msra.mxu0 0.0
        %2572 = vmatprep.subr.mxu0 0.0
        %2573 = vmatpush1.msra.mxu0 0.0
        %2574 = vmatprep.subr.mxu0 0.0
        %2575 = vmatpush1.msra.mxu0 0.0
        %2576 = vmatprep.subr.mxu0 0.0
        %2577 = vmatpush1.msra.mxu0 0.0
        %2578 = vmatprep.subr.mxu0 0.0
        %2579 = vmatpush1.msra.mxu0 0.0
        %2580 = vmatprep.subr.mxu0 0.0
        %2581 = vmatpush1.msra.mxu0 0.0
        %2582 = vmatprep.subr.mxu0 0.0
        %2583 = vmatpush1.msra.mxu0 0.0
        %2584 = vmatprep.mubr.f32.mxu0 0.0
        %2585 = vmatmul.mubr.f32.gmra.mrb[0].mxu0 %v2518
        %v2586 = vpop.f32.mrb[0].mxu0
        %v2587 = vadd.f32 %v2515, %v2586
        %v2588 = vpop.f32.mrb[0].mxu0
        %2589 = vdwg.mxu0
        %2590 = vst [vmem:[%s323] sm:$0x3] %v2587
        %s2591 = sand.u32 %s225, 1
        %s2592 = scalar_lea.sflag [#allocation3], %s2591
        %s2593 = sand.u32 %s225, 1
        %s2594 = smul.addr %s2593, 2
        %s2595 = scalar_lea.vmem [#allocation2], %s2594
        // Predicated region
        $region57: #{tpu_custom_call.1} parent=55 // pred_check
          %p2596 = pneg %p235
        $region58: #{tpu_custom_call.1} parent=55 // pred_check_branch
          %2598 = sbr.rel (%p2596) target = $region60
        $region59: #{tpu_custom_call.1} parent=55 // pred_region
          %s2600 = ssub.s32 32, 32
          %2601 = vsyncadd %s2592, %s2600
          %s2602 = smul.addr %s23, 32
          %s2603 = scalar_lea.hbm %s9, %s2602
          %s2605 = sshll.u32 %s2595, 4
          %s2606 = int_to_ptr.vmem [resolvable:$true] %s2605
          %2608 = dma.vmem_to_hbm [thread:$0]  %s2606, 32, %s2603, %s2592
        $region60: #{tpu_custom_call.1} parent=55 // pred_fallthru
          _
      $region56: #{tpu_custom_call.1} parent=5 // pred_fallthru
        _
      %p2609 = scmp.le.s32.totalorder 2, %s18
      // Predicated region
      $region61: #{tpu_custom_call.1} parent=5 // pred_check
        %p2610 = pneg %p2609
      $region62: #{tpu_custom_call.1} parent=5 // pred_check_branch
        %2612 = sbr.rel (%p2610) target = $region64
      $region63: #{tpu_custom_call.1} parent=5 // pred_region
        %s2613 = ssub.s32 %s18, 2
        // Predicated region
        $region65: #{tpu_custom_call.1} parent=63 // pred_check
          %p2614 = pneg %p241
        $region66: #{tpu_custom_call.1} parent=63 // pred_check_branch
          %2616 = sbr.rel (%p2614) target = $region68
        $region67: #{tpu_custom_call.1} parent=63 // pred_region
          %s2617 = sand.u32 %s226, 1
          %s2618 = scalar_lea.sflag [#allocation3], %s2617
          %s2619 = sand.u32 %s226, 1
          %s2620 = smul.addr %s2619, 2
          %s2621 = scalar_lea.vmem [#allocation2], %s2620
          %2622 = dma.done %s2618, 32
        $region68: #{tpu_custom_call.1} parent=63 // pred_fallthru
          _
      $region64: #{tpu_custom_call.1} parent=5 // pred_fallthru
        _
    $region6: #{tpu_custom_call.1} parent=1 // loop_footer
      %s22 = sadd.s32 1, %s18
    $region7: #{tpu_custom_call.1} parent=1 // loop_footer_branch
      %17 = sbr.rel target = $region3
    $region8: #{tpu_custom_call.1} parent=1 // loop_exit
      _
    %2623 = vsyncpa [#allocation3], 1
    %s2624 = scalar_lea.sflag [#allocation3], 1
    %2625 = vsyncpa %s2624, 1

</llo_original>
